<compile_context>
chip_gen: v6e
topology: v6e:2x2x1
jax: 0.10.0
libtpu: 0.0.40
codegen_flags: <defaults>
</compile_context>

<pallas_src>
import jax
import jax.numpy as jnp
from jax.experimental import pallas as pl
from jax.experimental.pallas import tpu as pltpu
import numpy as np


def _round_up(x, m):
    return ((x + m - 1) // m) * m


# --------------------------------------------------------------------------
# Kernel: one full decoder step.  Grid axis 0 tiles the (padded) vocab of the
# output projection; the LSTM + attention + concat front-end runs only at
# grid step 0 and its result is carried in VMEM scratch.
# --------------------------------------------------------------------------
def _decoder_kernel(x_ref, h0_ref, c0_ref, enc_ref, mask_ref, sbias_ref,
                    w_lstm_ref, b_lstm_ref,
                    w_dec_ref, w_enc_ref, v_ref,
                    w_cat_ref, b_cat_ref,
                    w_out_ref, b_out_ref,
                    out_ref, h_out_ref, c_out_ref,
                    concat_sc):
    @pl.when(pl.program_id(0) == 0)
    def _front_end():
        Hp = h0_ref.shape[-1]                  # padded hidden (multiple of 128)
        x = x_ref[...]                         # (Bp, Ep)
        h0 = h0_ref[...]                       # (Bp, Hp)
        c0 = c0_ref[...]                       # (Bp, Hp)
        enc = enc_ref[...]                     # (Sp, Bp, Hp)  seq-first, native
        Sp, Bp, _ = enc.shape

        # -------- LSTM cell: single fused GEMM ([x ; h0] @ [w_ih.T ; w_hh.T]) -----
        xh = jnp.concatenate([x, h0], axis=1)                    # (Bp, Ep+Hp)
        gates = (jnp.dot(xh, w_lstm_ref[...],
                         preferred_element_type=jnp.float32)
                 + b_lstm_ref[...])                              # (Bp, 4*Hp)
        i_g = jax.nn.sigmoid(gates[:, 0 * Hp:1 * Hp])
        f_g = jax.nn.sigmoid(gates[:, 1 * Hp:2 * Hp])
        g_g = jnp.tanh(gates[:, 2 * Hp:3 * Hp])
        o_g = jax.nn.sigmoid(gates[:, 3 * Hp:4 * Hp])
        c_new = f_g * c0 + i_g * g_g
        h_new = o_g * jnp.tanh(c_new)          # (Bp, Hp) == rnn_output == s_t

        # -------- Luong attention (seq-first layout, lane-broadcast scores) -------
        dec_part = jnp.dot(h_new, w_dec_ref[...],
                           preferred_element_type=jnp.float32)   # (Bp, Hp)
        enc_part = jnp.dot(enc.reshape(Sp * Bp, Hp), w_enc_ref[...],
                           preferred_element_type=jnp.float32).reshape(Sp, Bp, Hp)
        energy = jnp.tanh(dec_part[None, :, :] + enc_part)       # (Sp, Bp, Hp)

        # v_ref columns are all `v`: score[s,b] broadcast to every lane (MXU,
        # no XLU lane-reduction); sbias is -1e9 on zero-padded sequence rows.
        score = jnp.dot(energy.reshape(Sp * Bp, Hp), v_ref[...],
                        preferred_element_type=jnp.float32).reshape(Sp, Bp, Hp)
        score = score + sbias_ref[...]                           # (Sp, Bp, Hp)

        # masked softmax over the sequence axis (axis 0), fused renormalization:
        #   a = e*mask / (sum(e*mask) + eps*sum(e))   (== reference semantics)
        m = jnp.max(score, axis=0, keepdims=True)
        e = jnp.exp(score - m)                                   # (Sp, Bp, Hp)
        em = e * mask_ref[...]
        sum_e = jnp.sum(e, axis=0, keepdims=True)
        sum_em = jnp.sum(em, axis=0, keepdims=True)
        a = em * pl.reciprocal(sum_em + 1e-10 * sum_e, approx=True)

        context = jnp.sum(a * enc, axis=0)                       # (Bp, Hp)

        # -------- concat projection: single fused GEMM ---------------------------
        hc = jnp.concatenate([h_new, context], axis=1)           # (Bp, 2*Hp)
        concat_sc[...] = jnp.tanh(
            jnp.dot(hc, w_cat_ref[...], preferred_element_type=jnp.float32)
            + b_cat_ref[...])                                    # (Bp, Hp)

        h_out_ref[...] = h_new
        c_out_ref[...] = c_new

    # -------- output projection, tiled over the vocab grid axis ------------------
    out_ref[...] = (jnp.dot(concat_sc[...], w_out_ref[...],
                            preferred_element_type=jnp.float32)
                    + b_out_ref[...])                            # (Bp, TN)


# --------------------------------------------------------------------------
# One-time parameter preparation: transpose + zero-pad to (8,128)-aligned
# shapes, fuse LSTM / concat weight pairs, pre-sum LSTM biases, broadcast v.
# --------------------------------------------------------------------------
def prepare_decoder_params(params, tile_v=512):
    H = params["w_hh"].shape[1]
    E = params["w_ih"].shape[1]
    V = params["w_out"].shape[0]
    Hp = _round_up(H, 128)
    Ep = _round_up(E, 128)
    Vp = _round_up(V, 128)
    f32 = jnp.float32

    # fused LSTM weight: rows [0:Ep) input part, [Ep:Ep+Hp) hidden part;
    # columns: 4 gate blocks (i, f, g, o), each padded to a full Hp block.
    w_lstm = jnp.zeros((Ep + Hp, 4 * Hp), f32)
    b_lstm = jnp.zeros((1, 4 * Hp), f32)
    for k in range(4):
        w_lstm = w_lstm.at[:E, k * Hp:k * Hp + H].set(params["w_ih"][k * H:(k + 1) * H, :].T)
        w_lstm = w_lstm.at[Ep:Ep + H, k * Hp:k * Hp + H].set(params["w_hh"][k * H:(k + 1) * H, :].T)
        b_lstm = b_lstm.at[0, k * Hp:k * Hp + H].set(
            params["b_ih"][k * H:(k + 1) * H] + params["b_hh"][k * H:(k + 1) * H])

    def pad2(w, shape):
        return jnp.zeros(shape, f32).at[:w.shape[0], :w.shape[1]].set(w)

    # fused concat weight: rows [0:Hp) decoder-state half, [Hp:2Hp) context half.
    w_cat = jnp.zeros((2 * Hp, Hp), f32)
    w_cat = w_cat.at[:H, :H].set(params["w_cat"][:, :H].T)
    w_cat = w_cat.at[Hp:Hp + H, :H].set(params["w_cat"][:, H:].T)

    # v broadcast into every column so the score matmul yields lane-broadcast scores.
    v_mat = jnp.zeros((Hp, Hp), f32).at[:H, :].set(
        jnp.broadcast_to(params["v"][:, None], (H, Hp)))

    TN = tile_v if (Vp % tile_v == 0) else 128   # Vp is a multiple of 128

    prepared = dict(
        w_lstm=w_lstm, b_lstm=b_lstm,
        w_dec=pad2(params["w_attn"][:, :H].T, (Hp, Hp)),
        w_enc=pad2(params["w_attn"][:, H:].T, (Hp, Hp)),
        v_mat=v_mat,
        w_cat=w_cat,
        b_cat=jnp.zeros((1, Hp), f32).at[0, :H].set(params["b_cat"]),
        w_out=pad2(params["w_out"].T, (Hp, Vp)),
        b_out=jnp.zeros((1, Vp), f32).at[0, :V].set(params["b_out"]),
    )
    prepared["dims"] = (H, E, V, Hp, Ep, Vp, TN)
    return prepared


# --------------------------------------------------------------------------
# One-time encoder-side preparation (constant across all decode steps):
# pad encoder_outputs / inp_mask and build the sequence-validity bias.
# --------------------------------------------------------------------------
def prepare_encoder_inputs(prepared, encoder_outputs, inp_mask):
    H, E, V, Hp, Ep, Vp, TN = prepared["dims"]
    f32 = jnp.float32
    S, B, _ = encoder_outputs.shape
    Sp = _round_up(S, 8)
    Bp = _round_up(B, 8)
    enc_p = jnp.zeros((Sp, Bp, Hp), f32).at[:S, :B, :H].set(encoder_outputs)
    mask_p = jnp.zeros((Sp, Bp, 1), f32).at[:S, :B, 0].set(inp_mask)
    # additive bias removing zero-padded sequence rows from the softmax sums
    sbias_p = jnp.full((Sp, Bp, 1), -1e9, f32).at[:S].set(0.0)
    return dict(enc=enc_p, mask=mask_p, sbias=sbias_p, S=S, B=B, Sp=Sp, Bp=Bp)


# --------------------------------------------------------------------------
# Wrapper: Pallas equivalent of Decoder.forward (n_layers=1).
# --------------------------------------------------------------------------
def decoder_forward(prepared, enc_prep, inp_emb, last_hidden):
    H, E, V, Hp, Ep, Vp, TN = prepared["dims"]
    f32 = jnp.float32

    h0_full, c0_full = last_hidden                     # (1, B, H) each
    B = min(h0_full.shape[1], inp_emb.shape[0])
    x = inp_emb[-B:]                                   # (B, E)
    h0 = h0_full[-1]                                   # (B, H)
    c0 = c0_full[-1]
    Bp, Sp = enc_prep["Bp"], enc_prep["Sp"]

    # per-step activations only (tiny); enc/mask padding is done once in prepare.
    x_p = jnp.zeros((Bp, Ep), f32).at[:B, :E].set(x)
    h0_p = jnp.zeros((Bp, Hp), f32).at[:B, :H].set(h0)
    c0_p = jnp.zeros((Bp, Hp), f32).at[:B, :H].set(c0)

    nV = Vp // TN
    const2 = lambda j: (0, 0)
    const3 = lambda j: (0, 0, 0)

    in_specs = [
        pl.BlockSpec((Bp, Ep), const2),                # x
        pl.BlockSpec((Bp, Hp), const2),                # h0
        pl.BlockSpec((Bp, Hp), const2),                # c0
        pl.BlockSpec((Sp, Bp, Hp), const3),            # enc
        pl.BlockSpec((Sp, Bp, 1), const3),             # mask
        pl.BlockSpec((Sp, Bp, 1), const3),             # seq-validity bias
        pl.BlockSpec((Ep + Hp, 4 * Hp), const2),       # fused LSTM weight
        pl.BlockSpec((1, 4 * Hp), const2),             # fused LSTM bias
        pl.BlockSpec((Hp, Hp), const2),                # w_dec
        pl.BlockSpec((Hp, Hp), const2),                # w_enc
        pl.BlockSpec((Hp, Hp), const2),                # v (lane-broadcast)
        pl.BlockSpec((2 * Hp, Hp), const2),            # fused concat weight
        pl.BlockSpec((1, Hp), const2),                 # concat bias
        pl.BlockSpec((Hp, TN), lambda j: (0, j)),      # w_out vocab tile
        pl.BlockSpec((1, TN), lambda j: (0, j)),       # b_out vocab tile
    ]
    out_specs = (
        pl.BlockSpec((Bp, TN), lambda j: (0, j)),      # logits vocab tile
        pl.BlockSpec((Bp, Hp), const2),                # h_new (resident over grid)
        pl.BlockSpec((Bp, Hp), const2),                # c_new (resident over grid)
    )

    args = (x_p, h0_p, c0_p, enc_prep["enc"], enc_prep["mask"], enc_prep["sbias"],
            prepared["w_lstm"], prepared["b_lstm"],
            prepared["w_dec"], prepared["w_enc"], prepared["v_mat"],
            prepared["w_cat"], prepared["b_cat"],
            prepared["w_out"], prepared["b_out"])

    # scoped-VMEM limit sized from the padded operands (+ double-buffer headroom),
    # capped below v7x's 64 MiB physical VMEM.
    est_bytes = 4 * (sum(int(np.prod(a.shape)) for a in args)
                     + Bp * Vp + 3 * Bp * Hp)
    vmem_limit = int(min(64 * 2**20, max(2 * est_bytes, 8 * 2**20)))

    out_p, h_p, c_p = pl.pallas_call(
        _decoder_kernel,
        out_shape=(
            jax.ShapeDtypeStruct((Bp, Vp), f32),
            jax.ShapeDtypeStruct((Bp, Hp), f32),
            jax.ShapeDtypeStruct((Bp, Hp), f32),
        ),
        grid_spec=pltpu.PrefetchScalarGridSpec(
            num_scalar_prefetch=0,
            grid=(nV,),
            in_specs=in_specs,
            out_specs=out_specs,
            scratch_shapes=[pltpu.VMEM((Bp, Hp), f32)],   # concat_out carry
        ),
        compiler_params=pltpu.CompilerParams(
            # 'arbitrary': h/c outputs + concat scratch are carried across the
            # vocab-tile axis, so it cannot be sharded without recompute.
            dimension_semantics=("arbitrary",),
            vmem_limit_bytes=vmem_limit,
        ),
    )(*args)

    out = out_p[:B, :V]
    hidden = (h_p[:B, :H][None, :, :], c_p[:B, :H][None, :, :])
    return out, hidden


# --------------------------------------------------------------------------
# Pure-JAX reference mirroring the PyTorch forward (eval mode).
# --------------------------------------------------------------------------
def _reference_forward(params, inp_emb, last_hidden, encoder_outputs, inp_mask):
    h0, c0 = last_hidden
    B = min(h0.shape[1], inp_emb.shape[0])
    x = inp_emb[-B:]
    h0, c0 = h0[-1], c0[-1]
    enc = jnp.transpose(encoder_outputs, (1, 0, 2))
    mask = jnp.transpose(inp_mask, (1, 0))
    H = h0.shape[-1]

    gates = x @ params["w_ih"].T + params["b_ih"] + h0 @ params["w_hh"].T + params["b_hh"]
    i = jax.nn.sigmoid(gates[:, :H]); f = jax.nn.sigmoid(gates[:, H:2 * H])
    g = jnp.tanh(gates[:, 2 * H:3 * H]); o = jax.nn.sigmoid(gates[:, 3 * H:])
    c_new = f * c0 + i * g
    h_new = o * jnp.tanh(c_new)

    S = enc.shape[1]
    H_rep = jnp.broadcast_to(h_new[:, None, :], (B, S, H))
    energy = jnp.tanh(jnp.concatenate([H_rep, enc], axis=2) @ params["w_attn"].T)
    score = jnp.einsum("bsh,h->bs", energy, params["v"])
    a = jax.nn.softmax(score, axis=1) * mask
    a = a / (jnp.sum(a, axis=1, keepdims=True) + 1e-10)
    context = jnp.einsum("bs,bsh->bh", a, enc)

    concat_out = jnp.tanh(jnp.concatenate([h_new, context], axis=1) @ params["w_cat"].T
                          + params["b_cat"])
    out = concat_out @ params["w_out"].T + params["b_out"]
    return out, (h_new[None], c_new[None])


def init_params(key, hidden_size, emb_dim, vocab_size):
    ks = jax.random.split(key, 10)
    s = 1.0 / np.sqrt(hidden_size)
    return {
        "w_ih": jax.random.uniform(ks[0], (4 * hidden_size, emb_dim), jnp.float32, -s, s),
        "w_hh": jax.random.uniform(ks[1], (4 * hidden_size, hidden_size), jnp.float32, -s, s),
        "b_ih": jax.random.uniform(ks[2], (4 * hidden_size,), jnp.float32, -s, s),
        "b_hh": jax.random.uniform(ks[3], (4 * hidden_size,), jnp.float32, -s, s),
        "w_attn": jax.random.uniform(ks[4], (hidden_size, 2 * hidden_size), jnp.float32, -s, s),
        "v": jax.random.normal(ks[5], (hidden_size,), jnp.float32) * s,
        "w_cat": jax.random.uniform(ks[6], (hidden_size, 2 * hidden_size), jnp.float32, -s, s),
        "b_cat": jax.random.uniform(ks[7], (hidden_size,), jnp.float32, -s, s),
        "w_out": jax.random.uniform(ks[8], (vocab_size, hidden_size), jnp.float32, -s, s),
        "b_out": jax.random.uniform(ks[9], (vocab_size,), jnp.float32, -s, s),
    }


if __name__ == "__main__":
    hidden_size, emb_dim, vocab_size = 32, 16, 64
    batch, seq_len = 4, 8

    key = jax.random.PRNGKey(0)
    k_par, k_emb, k_h, k_c, k_enc = jax.random.split(key, 5)

    params = init_params(k_par, hidden_size, emb_dim, vocab_size)
    prepared = prepare_decoder_params(params)       # one-time pad/transpose/fuse of weights

    inp_emb = jax.random.normal(k_emb, (batch, emb_dim), jnp.float32)
    last_hidden = (
        jax.random.normal(k_h, (1, batch, hidden_size), jnp.float32),
        jax.random.normal(k_c, (1, batch, hidden_size), jnp.float32),
    )
    encoder_outputs = jax.random.normal(k_enc, (seq_len, batch, hidden_size), jnp.float32)
    mask_np = np.ones((seq_len, batch), np.float32)
    mask_np[-2:, 1] = 0.0
    mask_np[-1:, 3] = 0.0
    inp_mask = jnp.asarray(mask_np)

    enc_prep = prepare_encoder_inputs(prepared, encoder_outputs, inp_mask)  # one-time

    out, hidden = decoder_forward(prepared, enc_prep, inp_emb, last_hidden)
    out = jax.block_until_ready(out)
    hidden = jax.block_until_ready(hidden)

    ref_out, ref_hidden = _reference_forward(params, inp_emb, last_hidden,
                                             encoder_outputs, inp_mask)
    np.testing.assert_allclose(np.asarray(out), np.asarray(ref_out), atol=2e-3, rtol=2e-3)
    np.testing.assert_allclose(np.asarray(hidden[0]), np.asarray(ref_hidden[0]), atol=2e-3, rtol=2e-3)
    np.testing.assert_allclose(np.asarray(hidden[1]), np.asarray(ref_hidden[1]), atol=2e-3, rtol=2e-3)

    print("KERNEL_OK")
</pallas_src>

<mosaic_0001>
module attributes {stable_mosaic.version = 11 : i64} {
  func.func @_decoder_kernel(%arg0: i32, %arg1: memref<8x128xf32, #tpu.memory_space<vmem>>, %arg2: memref<8x128xf32, #tpu.memory_space<vmem>>, %arg3: memref<8x128xf32, #tpu.memory_space<vmem>>, %arg4: memref<8x8x128xf32, #tpu.memory_space<vmem>>, %arg5: memref<8x8x1xf32, #tpu.memory_space<vmem>>, %arg6: memref<8x8x1xf32, #tpu.memory_space<vmem>>, %arg7: memref<256x512xf32, #tpu.memory_space<vmem>>, %arg8: memref<1x512xf32, #tpu.memory_space<vmem>>, %arg9: memref<128x128xf32, #tpu.memory_space<vmem>>, %arg10: memref<128x128xf32, #tpu.memory_space<vmem>>, %arg11: memref<128x128xf32, #tpu.memory_space<vmem>>, %arg12: memref<256x128xf32, #tpu.memory_space<vmem>>, %arg13: memref<1x128xf32, #tpu.memory_space<vmem>>, %arg14: memref<128x128xf32, #tpu.memory_space<vmem>>, %arg15: memref<1x128xf32, #tpu.memory_space<vmem>>, %arg16: memref<8x128xf32, #tpu.memory_space<vmem>>, %arg17: memref<8x128xf32, #tpu.memory_space<vmem>>, %arg18: memref<8x128xf32, #tpu.memory_space<vmem>>, %arg19: memref<8x128xf32, #tpu.memory_space<vmem>>) attributes {dimension_semantics = [#tpu.dimension_semantics<arbitrary>], iteration_bounds = array<i64: 1>, scalar_prefetch = 0 : i64, scratch_operands = 1 : i64, tpu.core_type = #tpu.core_type<tc>, window_params = [{pipeline_mode = #tpu.pipeline_mode<synchronous>, transform_indices = @transform_0, window_bounds = array<i64: 8, 128>}, {pipeline_mode = #tpu.pipeline_mode<synchronous>, transform_indices = @transform_1, window_bounds = array<i64: 8, 128>}, {pipeline_mode = #tpu.pipeline_mode<synchronous>, transform_indices = @transform_2, window_bounds = array<i64: 8, 128>}, {pipeline_mode = #tpu.pipeline_mode<synchronous>, transform_indices = @transform_3, window_bounds = array<i64: 8, 8, 128>}, {pipeline_mode = #tpu.pipeline_mode<synchronous>, transform_indices = @transform_4, window_bounds = array<i64: 8, 8, 1>}, {pipeline_mode = #tpu.pipeline_mode<synchronous>, transform_indices = @transform_5, window_bounds = array<i64: 8, 8, 1>}, {pipeline_mode = #tpu.pipeline_mode<synchronous>, transform_indices = @transform_6, window_bounds = array<i64: 256, 512>}, {pipeline_mode = #tpu.pipeline_mode<synchronous>, transform_indices = @transform_7, window_bounds = array<i64: 1, 512>}, {pipeline_mode = #tpu.pipeline_mode<synchronous>, transform_indices = @transform_8, window_bounds = array<i64: 128, 128>}, {pipeline_mode = #tpu.pipeline_mode<synchronous>, transform_indices = @transform_9, window_bounds = array<i64: 128, 128>}, {pipeline_mode = #tpu.pipeline_mode<synchronous>, transform_indices = @transform_10, window_bounds = array<i64: 128, 128>}, {pipeline_mode = #tpu.pipeline_mode<synchronous>, transform_indices = @transform_11, window_bounds = array<i64: 256, 128>}, {pipeline_mode = #tpu.pipeline_mode<synchronous>, transform_indices = @transform_12, window_bounds = array<i64: 1, 128>}, {transform_indices = @transform_13, window_bounds = array<i64: 128, 128>}, {transform_indices = @transform_14, window_bounds = array<i64: 1, 128>}, {transform_indices = @transform_15, window_bounds = array<i64: 8, 128>}, {pipeline_mode = #tpu.pipeline_mode<synchronous>, transform_indices = @transform_16, window_bounds = array<i64: 8, 128>}, {pipeline_mode = #tpu.pipeline_mode<synchronous>, transform_indices = @transform_17, window_bounds = array<i64: 8, 128>}]} {
    %c0_i32 = arith.constant 0 : i32
    %0 = arith.cmpi eq, %arg0, %c0_i32 : i32
    %1 = arith.extui %0 : i1 to i32
    %c0_i32_0 = arith.constant 0 : i32
    %2 = arith.cmpi ne, %1, %c0_i32_0 : i32
    scf.if %2 {
      %c0_8 = arith.constant 0 : index
      %c0_9 = arith.constant 0 : index
      %10 = vector.load %arg1[%c0_8, %c0_9] : memref<8x128xf32, #tpu.memory_space<vmem>>, vector<8x128xf32>
      %c0_10 = arith.constant 0 : index
      %c0_11 = arith.constant 0 : index
      %11 = vector.load %arg2[%c0_10, %c0_11] : memref<8x128xf32, #tpu.memory_space<vmem>>, vector<8x128xf32>
      %c0_12 = arith.constant 0 : index
      %c0_13 = arith.constant 0 : index
      %12 = vector.load %arg3[%c0_12, %c0_13] : memref<8x128xf32, #tpu.memory_space<vmem>>, vector<8x128xf32>
      %c0_14 = arith.constant 0 : index
      %c0_15 = arith.constant 0 : index
      %c0_16 = arith.constant 0 : index
      %13 = vector.load %arg4[%c0_14, %c0_15, %c0_16] : memref<8x8x128xf32, #tpu.memory_space<vmem>>, vector<8x8x128xf32>
      %14 = tpu.concatenate %10, %11 in 1 : vector<8x128xf32>, vector<8x128xf32> -> vector<8x256xf32>
      %c0_17 = arith.constant 0 : index
      %c0_18 = arith.constant 0 : index
      %15 = vector.load %arg7[%c0_17, %c0_18] : memref<256x512xf32, #tpu.memory_space<vmem>>, vector<256x512xf32>
      %cst_19 = arith.constant dense<0.000000e+00> : vector<8x512xf32>
      %16 = tpu.matmul %14, %15, %cst_19 {dimension_numbers = #tpu.dot_dimension_numbers<[1], [0], [0], [1], [0, 0, 1, 1], [], []>} : vector<8x256xf32>, vector<256x512xf32>, vector<8x512xf32> -> vector<8x512xf32>
      %c0_20 = arith.constant 0 : index
      %c0_21 = arith.constant 0 : index
      %17 = vector.load %arg8[%c0_20, %c0_21] : memref<1x512xf32, #tpu.memory_space<vmem>>, vector<1x512xf32>
      %18 = vector.broadcast %17 : vector<1x512xf32> to vector<8x512xf32>
      %19 = arith.addf %16, %18 : vector<8x512xf32>
      %20 = vector.extract_strided_slice %19 {offsets = [0, 0], sizes = [8, 128], strides = [1, 1]} : vector<8x512xf32> to vector<8x128xf32>
      %21 = arith.negf %20 : vector<8x128xf32>
      %22 = math.exp %21 : vector<8x128xf32>
      %cst_22 = arith.constant 1.000000e+00 : f32
      %23 = vector.broadcast %cst_22 : f32 to vector<8x128xf32>
      %24 = arith.addf %23, %22 : vector<8x128xf32>
      %25 = arith.divf %23, %24 : vector<8x128xf32>
      %26 = vector.extract_strided_slice %19 {offsets = [0, 128], sizes = [8, 128], strides = [1, 1]} : vector<8x512xf32> to vector<8x128xf32>
      %27 = arith.negf %26 : vector<8x128xf32>
      %28 = math.exp %27 : vector<8x128xf32>
      %cst_23 = arith.constant 1.000000e+00 : f32
      %29 = vector.broadcast %cst_23 : f32 to vector<8x128xf32>
      %30 = arith.addf %29, %28 : vector<8x128xf32>
      %31 = arith.divf %29, %30 : vector<8x128xf32>
      %32 = vector.extract_strided_slice %19 {offsets = [0, 256], sizes = [8, 128], strides = [1, 1]} : vector<8x512xf32> to vector<8x128xf32>
      %33 = math.tanh %32 : vector<8x128xf32>
      %34 = vector.extract_strided_slice %19 {offsets = [0, 384], sizes = [8, 128], strides = [1, 1]} : vector<8x512xf32> to vector<8x128xf32>
      %35 = arith.negf %34 : vector<8x128xf32>
      %36 = math.exp %35 : vector<8x128xf32>
      %cst_24 = arith.constant 1.000000e+00 : f32
      %37 = vector.broadcast %cst_24 : f32 to vector<8x128xf32>
      %38 = arith.addf %37, %36 : vector<8x128xf32>
      %39 = arith.divf %37, %38 : vector<8x128xf32>
      %40 = arith.mulf %31, %12 : vector<8x128xf32>
      %41 = arith.mulf %25, %33 : vector<8x128xf32>
      %42 = arith.addf %40, %41 : vector<8x128xf32>
      %43 = math.tanh %42 : vector<8x128xf32>
      %44 = arith.mulf %39, %43 : vector<8x128xf32>
      %c0_25 = arith.constant 0 : index
      %c0_26 = arith.constant 0 : index
      %45 = vector.load %arg9[%c0_25, %c0_26] : memref<128x128xf32, #tpu.memory_space<vmem>>, vector<128x128xf32>
      %cst_27 = arith.constant dense<0.000000e+00> : vector<8x128xf32>
      %46 = tpu.matmul %44, %45, %cst_27 {dimension_numbers = #tpu.dot_dimension_numbers<[1], [0], [0], [1], [0, 0, 1, 1], [], []>} : vector<8x128xf32>, vector<128x128xf32>, vector<8x128xf32> -> vector<8x128xf32>
      %47 = vector.shape_cast %13 : vector<8x8x128xf32> to vector<64x128xf32>
      %c0_28 = arith.constant 0 : index
      %c0_29 = arith.constant 0 : index
      %48 = vector.load %arg10[%c0_28, %c0_29] : memref<128x128xf32, #tpu.memory_space<vmem>>, vector<128x128xf32>
      %cst_30 = arith.constant dense<0.000000e+00> : vector<64x128xf32>
      %49 = tpu.matmul %47, %48, %cst_30 {dimension_numbers = #tpu.dot_dimension_numbers<[1], [0], [0], [1], [0, 0, 1, 1], [], []>} : vector<64x128xf32>, vector<128x128xf32>, vector<64x128xf32> -> vector<64x128xf32>
      %50 = vector.shape_cast %49 : vector<64x128xf32> to vector<8x8x128xf32>
      %51 = vector.shape_cast %46 : vector<8x128xf32> to vector<1x8x128xf32>
      %52 = vector.broadcast %51 : vector<1x8x128xf32> to vector<8x8x128xf32>
      %53 = arith.addf %52, %50 : vector<8x8x128xf32>
      %54 = math.tanh %53 : vector<8x8x128xf32>
      %55 = vector.shape_cast %54 : vector<8x8x128xf32> to vector<64x128xf32>
      %c0_31 = arith.constant 0 : index
      %c0_32 = arith.constant 0 : index
      %56 = vector.load %arg11[%c0_31, %c0_32] : memref<128x128xf32, #tpu.memory_space<vmem>>, vector<128x128xf32>
      %cst_33 = arith.constant dense<0.000000e+00> : vector<64x128xf32>
      %57 = tpu.matmul %55, %56, %cst_33 {dimension_numbers = #tpu.dot_dimension_numbers<[1], [0], [0], [1], [0, 0, 1, 1], [], []>} : vector<64x128xf32>, vector<128x128xf32>, vector<64x128xf32> -> vector<64x128xf32>
      %58 = vector.shape_cast %57 : vector<64x128xf32> to vector<8x8x128xf32>
      %c0_34 = arith.constant 0 : index
      %c0_35 = arith.constant 0 : index
      %c0_36 = arith.constant 0 : index
      %59 = vector.load %arg6[%c0_34, %c0_35, %c0_36] : memref<8x8x1xf32, #tpu.memory_space<vmem>>, vector<8x8x1xf32>
      %60 = vector.broadcast %59 : vector<8x8x1xf32> to vector<8x8x128xf32>
      %61 = arith.addf %58, %60 : vector<8x8x128xf32>
      %cst_37 = arith.constant dense<0xFF800000> : vector<8x128xf32>
      %62 = vector.multi_reduction <maximumf>, %61, %cst_37 [0] : vector<8x8x128xf32> to vector<8x128xf32>
      %63 = vector.shape_cast %62 : vector<8x128xf32> to vector<1x8x128xf32>
      %64 = vector.broadcast %63 : vector<1x8x128xf32> to vector<8x8x128xf32>
      %65 = arith.subf %61, %64 : vector<8x8x128xf32>
      %66 = math.exp %65 : vector<8x8x128xf32>
      %c0_38 = arith.constant 0 : index
      %c0_39 = arith.constant 0 : index
      %c0_40 = arith.constant 0 : index
      %67 = vector.load %arg5[%c0_38, %c0_39, %c0_40] : memref<8x8x1xf32, #tpu.memory_space<vmem>>, vector<8x8x1xf32>
      %68 = vector.broadcast %67 : vector<8x8x1xf32> to vector<8x8x128xf32>
      %69 = arith.mulf %66, %68 : vector<8x8x128xf32>
      %cst_41 = arith.constant dense<0.000000e+00> : vector<8x128xf32>
      %70 = vector.multi_reduction <add>, %66, %cst_41 [0] : vector<8x8x128xf32> to vector<8x128xf32>
      %71 = vector.shape_cast %70 : vector<8x128xf32> to vector<1x8x128xf32>
      %cst_42 = arith.constant dense<0.000000e+00> : vector<8x128xf32>
      %72 = vector.multi_reduction <add>, %69, %cst_42 [0] : vector<8x8x128xf32> to vector<8x128xf32>
      %73 = vector.shape_cast %72 : vector<8x128xf32> to vector<1x8x128xf32>
      %cst_43 = arith.constant 1.000000e-10 : f32
      %74 = vector.broadcast %cst_43 : f32 to vector<1x8x128xf32>
      %75 = arith.mulf %74, %71 : vector<1x8x128xf32>
      %76 = arith.addf %73, %75 : vector<1x8x128xf32>
      %77 = tpu.reciprocal %76 {approx = true} : vector<1x8x128xf32> -> vector<1x8x128xf32>
      %78 = vector.broadcast %77 : vector<1x8x128xf32> to vector<8x8x128xf32>
      %79 = arith.mulf %69, %78 : vector<8x8x128xf32>
      %80 = arith.mulf %79, %13 : vector<8x8x128xf32>
      %cst_44 = arith.constant dense<0.000000e+00> : vector<8x128xf32>
      %81 = vector.multi_reduction <add>, %80, %cst_44 [0] : vector<8x8x128xf32> to vector<8x128xf32>
      %82 = tpu.concatenate %44, %81 in 1 : vector<8x128xf32>, vector<8x128xf32> -> vector<8x256xf32>
      %c0_45 = arith.constant 0 : index
      %c0_46 = arith.constant 0 : index
      %83 = vector.load %arg12[%c0_45, %c0_46] : memref<256x128xf32, #tpu.memory_space<vmem>>, vector<256x128xf32>
      %cst_47 = arith.constant dense<0.000000e+00> : vector<8x128xf32>
      %84 = tpu.matmul %82, %83, %cst_47 {dimension_numbers = #tpu.dot_dimension_numbers<[1], [0], [0], [1], [0, 0, 1, 1], [], []>} : vector<8x256xf32>, vector<256x128xf32>, vector<8x128xf32> -> vector<8x128xf32>
      %c0_48 = arith.constant 0 : index
      %c0_49 = arith.constant 0 : index
      %85 = vector.load %arg13[%c0_48, %c0_49] : memref<1x128xf32, #tpu.memory_space<vmem>>, vector<1x128xf32>
      %86 = vector.broadcast %85 : vector<1x128xf32> to vector<8x128xf32>
      %87 = arith.addf %84, %86 : vector<8x128xf32>
      %88 = math.tanh %87 : vector<8x128xf32>
      %c0_50 = arith.constant 0 : index
      %c0_51 = arith.constant 0 : index
      %89 = vector.load %arg19[%c0_50, %c0_51] : memref<8x128xf32, #tpu.memory_space<vmem>>, vector<8x128xf32>
      tpu.vector_store %arg19[%c0_50, %c0_51], %88 {strides = array<i32>} : memref<8x128xf32, #tpu.memory_space<vmem>>, vector<8x128xf32>,
      %c0_52 = arith.constant 0 : index
      %c0_53 = arith.constant 0 : index
      %90 = vector.load %arg17[%c0_52, %c0_53] : memref<8x128xf32, #tpu.memory_space<vmem>>, vector<8x128xf32>
      tpu.vector_store %arg17[%c0_52, %c0_53], %44 {strides = array<i32>} : memref<8x128xf32, #tpu.memory_space<vmem>>, vector<8x128xf32>,
      %c0_54 = arith.constant 0 : index
      %c0_55 = arith.constant 0 : index
      %91 = vector.load %arg18[%c0_54, %c0_55] : memref<8x128xf32, #tpu.memory_space<vmem>>, vector<8x128xf32>
      tpu.vector_store %arg18[%c0_54, %c0_55], %42 {strides = array<i32>} : memref<8x128xf32, #tpu.memory_space<vmem>>, vector<8x128xf32>,
    } else {
    }
    %c0 = arith.constant 0 : index
    %c0_1 = arith.constant 0 : index
    %3 = vector.load %arg19[%c0, %c0_1] : memref<8x128xf32, #tpu.memory_space<vmem>>, vector<8x128xf32>
    %c0_2 = arith.constant 0 : index
    %c0_3 = arith.constant 0 : index
    %4 = vector.load %arg14[%c0_2, %c0_3] : memref<128x128xf32, #tpu.memory_space<vmem>>, vector<128x128xf32>
    %cst = arith.constant dense<0.000000e+00> : vector<8x128xf32>
    %5 = tpu.matmul %3, %4, %cst {dimension_numbers = #tpu.dot_dimension_numbers<[1], [0], [0], [1], [0, 0, 1, 1], [], []>} : vector<8x128xf32>, vector<128x128xf32>, vector<8x128xf32> -> vector<8x128xf32>
    %c0_4 = arith.constant 0 : index
    %c0_5 = arith.constant 0 : index
    %6 = vector.load %arg15[%c0_4, %c0_5] : memref<1x128xf32, #tpu.memory_space<vmem>>, vector<1x128xf32>
    %7 = vector.broadcast %6 : vector<1x128xf32> to vector<8x128xf32>
    %8 = arith.addf %5, %7 : vector<8x128xf32>
    %c0_6 = arith.constant 0 : index
    %c0_7 = arith.constant 0 : index
    %9 = vector.load %arg16[%c0_6, %c0_7] : memref<8x128xf32, #tpu.memory_space<vmem>>, vector<8x128xf32>
    tpu.vector_store %arg16[%c0_6, %c0_7], %8 {strides = array<i32>} : memref<8x128xf32, #tpu.memory_space<vmem>>, vector<8x128xf32>,
    return
  }
  func.func @transform_0(%arg0: i32) -> (i32, i32) {
    %c0_i32 = arith.constant 0 : i32
    %c0_i32_0 = arith.constant 0 : i32
    %c0_i32_1 = arith.constant 0 : i32
    return %c0_i32, %c0_i32_0 : i32, i32
  }
  func.func @transform_1(%arg0: i32) -> (i32, i32) {
    %c0_i32 = arith.constant 0 : i32
    %c0_i32_0 = arith.constant 0 : i32
    %c0_i32_1 = arith.constant 0 : i32
    return %c0_i32, %c0_i32_0 : i32, i32
  }
  func.func @transform_2(%arg0: i32) -> (i32, i32) {
    %c0_i32 = arith.constant 0 : i32
    %c0_i32_0 = arith.constant 0 : i32
    %c0_i32_1 = arith.constant 0 : i32
    return %c0_i32, %c0_i32_0 : i32, i32
  }
  func.func @transform_3(%arg0: i32) -> (i32, i32, i32) {
    %c0_i32 = arith.constant 0 : i32
    %c0_i32_0 = arith.constant 0 : i32
    %c0_i32_1 = arith.constant 0 : i32
    %c0_i32_2 = arith.constant 0 : i32
    return %c0_i32, %c0_i32_0, %c0_i32_1 : i32, i32, i32
  }
  func.func @transform_4(%arg0: i32) -> (i32, i32, i32) {
    %c0_i32 = arith.constant 0 : i32
    %c0_i32_0 = arith.constant 0 : i32
    %c0_i32_1 = arith.constant 0 : i32
    %c0_i32_2 = arith.constant 0 : i32
    return %c0_i32, %c0_i32_0, %c0_i32_1 : i32, i32, i32
  }
  func.func @transform_5(%arg0: i32) -> (i32, i32, i32) {
    %c0_i32 = arith.constant 0 : i32
    %c0_i32_0 = arith.constant 0 : i32
    %c0_i32_1 = arith.constant 0 : i32
    %c0_i32_2 = arith.constant 0 : i32
    return %c0_i32, %c0_i32_0, %c0_i32_1 : i32, i32, i32
  }
  func.func @transform_6(%arg0: i32) -> (i32, i32) {
    %c0_i32 = arith.constant 0 : i32
    %c0_i32_0 = arith.constant 0 : i32
    %c0_i32_1 = arith.constant 0 : i32
    return %c0_i32, %c0_i32_0 : i32, i32
  }
  func.func @transform_7(%arg0: i32) -> (i32, i32) {
    %c0_i32 = arith.constant 0 : i32
    %c0_i32_0 = arith.constant 0 : i32
    %c0_i32_1 = arith.constant 0 : i32
    return %c0_i32, %c0_i32_0 : i32, i32
  }
  func.func @transform_8(%arg0: i32) -> (i32, i32) {
    %c0_i32 = arith.constant 0 : i32
    %c0_i32_0 = arith.constant 0 : i32
    %c0_i32_1 = arith.constant 0 : i32
    return %c0_i32, %c0_i32_0 : i32, i32
  }
  func.func @transform_9(%arg0: i32) -> (i32, i32) {
    %c0_i32 = arith.constant 0 : i32
    %c0_i32_0 = arith.constant 0 : i32
    %c0_i32_1 = arith.constant 0 : i32
    return %c0_i32, %c0_i32_0 : i32, i32
  }
  func.func @transform_10(%arg0: i32) -> (i32, i32) {
    %c0_i32 = arith.constant 0 : i32
    %c0_i32_0 = arith.constant 0 : i32
    %c0_i32_1 = arith.constant 0 : i32
    return %c0_i32, %c0_i32_0 : i32, i32
  }
  func.func @transform_11(%arg0: i32) -> (i32, i32) {
    %c0_i32 = arith.constant 0 : i32
    %c0_i32_0 = arith.constant 0 : i32
    %c0_i32_1 = arith.constant 0 : i32
    return %c0_i32, %c0_i32_0 : i32, i32
  }
  func.func @transform_12(%arg0: i32) -> (i32, i32) {
    %c0_i32 = arith.constant 0 : i32
    %c0_i32_0 = arith.constant 0 : i32
    %c0_i32_1 = arith.constant 0 : i32
    return %c0_i32, %c0_i32_0 : i32, i32
  }
  func.func @transform_13(%arg0: i32) -> (i32, i32) {
    %c0_i32 = arith.constant 0 : i32
    %c0_i32_0 = arith.constant 0 : i32
    return %c0_i32, %arg0 : i32, i32
  }
  func.func @transform_14(%arg0: i32) -> (i32, i32) {
    %c0_i32 = arith.constant 0 : i32
    %c0_i32_0 = arith.constant 0 : i32
    return %c0_i32, %arg0 : i32, i32
  }
  func.func @transform_15(%arg0: i32) -> (i32, i32) {
    %c0_i32 = arith.constant 0 : i32
    %c0_i32_0 = arith.constant 0 : i32
    return %c0_i32, %arg0 : i32, i32
  }
  func.func @transform_16(%arg0: i32) -> (i32, i32) {
    %c0_i32 = arith.constant 0 : i32
    %c0_i32_0 = arith.constant 0 : i32
    %c0_i32_1 = arith.constant 0 : i32
    return %c0_i32, %c0_i32_0 : i32, i32
  }
  func.func @transform_17(%arg0: i32) -> (i32, i32) {
    %c0_i32 = arith.constant 0 : i32
    %c0_i32_0 = arith.constant 0 : i32
    %c0_i32_1 = arith.constant 0 : i32
    return %c0_i32, %c0_i32_0 : i32, i32
  }
}

</mosaic_0001>

<llo_original>
// kernel: tpu_custom_call.1
$region0: #{tpu_custom_call.1}
  #allocation0 [shape = 'u32[]', space=smem, size = 0x4, offset = 0x4, fixed_abs, tag = 'smem constant byte address 0x4 - core index']
  #allocation1 [shape = 'u32[144,128]{1,0:T(1,128)}', space=vmem, size = 0x12000, scoped, tag = 'internal scratch']
  #allocation2 [shape = 'f32[8,128]{1,0:T(8,128)}', space=vmem, size = 0x1000, scoped, tag = 'scratch operand']
  %s0 = inlined_call_operand.vmem [shape: f32[8,128], index: 0, kind: input, shape index: {}]
  %s1 = inlined_call_operand.vmem [shape: f32[8,128], index: 1, kind: input, shape index: {}]
  %s2 = inlined_call_operand.vmem [shape: f32[8,128], index: 2, kind: input, shape index: {}]
  %s3 = inlined_call_operand.hbm [shape: f32[8,8,128], index: 3, kind: input, shape index: {}]
  %s4 = inlined_call_operand.vmem [shape: f32[8,8,1], index: 4, kind: input, shape index: {}]
  %s5 = inlined_call_operand.vmem [shape: f32[8,8,1], index: 5, kind: input, shape index: {}]
  %s6 = inlined_call_operand.hbm [shape: f32[256,512], index: 6, kind: input, shape index: {}]
  %s7 = inlined_call_operand.vmem [shape: f32[1,512], index: 7, kind: input, shape index: {}]
  %s8 = inlined_call_operand.vmem [shape: f32[128,128], index: 8, kind: input, shape index: {}]
  %s9 = inlined_call_operand.hbm [shape: f32[128,128], index: 9, kind: input, shape index: {}]
  %s10 = inlined_call_operand.hbm [shape: f32[128,128], index: 10, kind: input, shape index: {}]
  %s11 = inlined_call_operand.hbm [shape: f32[256,128], index: 11, kind: input, shape index: {}]
  %s12 = inlined_call_operand.vmem [shape: f32[1,128], index: 12, kind: input, shape index: {}]
  %s13 = inlined_call_operand.hbm [shape: f32[128,128], index: 13, kind: input, shape index: {}]
  %s14 = inlined_call_operand.vmem [shape: f32[1,128], index: 14, kind: input, shape index: {}]
  %s15 = inlined_call_operand.hbm [shape: f32[8,128], index: 15, kind: output, shape index: {0}]
  %s16 = inlined_call_operand.hbm [shape: f32[8,128], index: 16, kind: output, shape index: {1}]
  %s17 = inlined_call_operand.hbm [shape: f32[8,128], index: 17, kind: output, shape index: {2}]
  %18 = xla_tuple %s15, %s16, %s17
  %s19 = sld [smem:[#allocation0]]
  $region114: #{tpu_custom_call.1} parent=0
    _
  %s21 = ssub.s32 1, %s19
  %s22 = scalar_select 0, %s21, %s19
  $region1: #{tpu_custom_call.1} parent=0
    #allocation3 [shape = 'u8[32768]{0}', space=vmem, size = 0x8000, scoped, tag = 'input window, operand 3, single buffered']
    #allocation4 [shape = 's32[1]{0}', space=sflag, size = 0x4, scoped, tag = 'scoped memory for tpu_custom_call.1']
    #allocation5 [shape = 's32[1]{0}', space=sflag, size = 0x4, scoped, tag = 'scoped memory for tpu_custom_call.1']
    #allocation6 [shape = 'u8[524288]{0}', space=vmem, size = 0x80000, scoped, tag = 'input window, operand 6, single buffered']
    #allocation7 [shape = 's32[1]{0}', space=sflag, size = 0x4, scoped, tag = 'scoped memory for tpu_custom_call.1']
    #allocation8 [shape = 'u8[65536]{0}', space=vmem, size = 0x10000, scoped, tag = 'input window, operand 9, single buffered']
    #allocation9 [shape = 'u8[65536]{0}', space=vmem, size = 0x10000, scoped, tag = 'input window, operand 10, single buffered']
    #allocation10 [shape = 's32[1]{0}', space=sflag, size = 0x4, scoped, tag = 'scoped memory for tpu_custom_call.1']
    #allocation11 [shape = 'u8[131072]{0}', space=vmem, size = 0x20000, scoped, tag = 'input window, operand 11, single buffered']
    #allocation12 [shape = 'u8[65536]{0}', space=vmem, size = 0x10000, scoped, tag = 'input window, operand 13, single buffered']
    #allocation13 [shape = 's32[1]{0}', space=sflag, size = 0x4, scoped, tag = 'scoped memory for tpu_custom_call.1']
    #allocation14 [shape = 'u8[4096]{0}', space=vmem, size = 0x1000, scoped, tag = 'output window, operand 0, single buffered']
    #allocation15 [shape = 'u8[4096]{0}', space=vmem, size = 0x1000, scoped, tag = 'output window, operand 1, single buffered']
    #allocation16 [shape = 's32[1]{0}', space=sflag, size = 0x4, scoped, tag = 'scoped memory for tpu_custom_call.1']
    #allocation17 [shape = 'u8[4096]{0}', space=vmem, size = 0x1000, scoped, tag = 'output window, operand 2, single buffered']
    %23 = vsyncpa [#allocation4], 0
    %24 = vsyncpa [#allocation7], 0
    %25 = vsyncpa [#allocation10], 0
    %26 = vsyncpa [#allocation13], 0
    %27 = vsyncpa [#allocation5], 0
    %28 = vsyncpa [#allocation16], 0
    // Predicated region
    $region2: #{tpu_custom_call.1} parent=1 // pred_check
      _
    $region3: #{tpu_custom_call.1} parent=1 // pred_check_branch
      %30 = sbr.rel (0) target = $region5
    $region4: #{tpu_custom_call.1} parent=1 // pred_region
      _
    $region5: #{tpu_custom_call.1} parent=1 // pred_fallthru
      _
    // Predicated region
    $region6: #{tpu_custom_call.1} parent=1 // pred_check
      _
    $region7: #{tpu_custom_call.1} parent=1 // pred_check_branch
      %32 = sbr.rel (0) target = $region9
    $region8: #{tpu_custom_call.1} parent=1 // pred_region
      _
    $region9: #{tpu_custom_call.1} parent=1 // pred_fallthru
      _
    // Predicated region
    $region10: #{tpu_custom_call.1} parent=1 // pred_check
      _
    $region11: #{tpu_custom_call.1} parent=1 // pred_check_branch
      %34 = sbr.rel (0) target = $region13
    $region12: #{tpu_custom_call.1} parent=1 // pred_region
      _
    $region13: #{tpu_custom_call.1} parent=1 // pred_fallthru
      _
    // Predicated region
    $region14: #{tpu_custom_call.1} parent=1 // pred_check
      _
    $region15: #{tpu_custom_call.1} parent=1 // pred_check_branch
      %36 = sbr.rel (0) target = $region17
    $region16: #{tpu_custom_call.1} parent=1 // pred_region
      %s38 = ssub.s32 1024, 1024
      %39 = vsyncadd [#allocation4], %s38
      %s40 = sshll.u32 [#allocation3], 4
      %s41 = int_to_ptr.vmem [resolvable:$true] %s40
      %46 = dma.hbm_to_vmem [thread:$0]  %s3, 1024, %s41, [#allocation4], 128, 128, 8
    $region17: #{tpu_custom_call.1} parent=1 // pred_fallthru
      _
    // Predicated region
    $region18: #{tpu_custom_call.1} parent=1 // pred_check
      _
    $region19: #{tpu_custom_call.1} parent=1 // pred_check_branch
      %48 = sbr.rel (0) target = $region21
    $region20: #{tpu_custom_call.1} parent=1 // pred_region
      _
    $region21: #{tpu_custom_call.1} parent=1 // pred_fallthru
      _
    // Predicated region
    $region22: #{tpu_custom_call.1} parent=1 // pred_check
      _
    $region23: #{tpu_custom_call.1} parent=1 // pred_check_branch
      %50 = sbr.rel (0) target = $region25
    $region24: #{tpu_custom_call.1} parent=1 // pred_region
      _
    $region25: #{tpu_custom_call.1} parent=1 // pred_fallthru
      _
    // Predicated region
    $region26: #{tpu_custom_call.1} parent=1 // pred_check
      _
    $region27: #{tpu_custom_call.1} parent=1 // pred_check_branch
      %52 = sbr.rel (0) target = $region29
    $region28: #{tpu_custom_call.1} parent=1 // pred_region
      %s54 = ssub.s32 16384, 16384
      %55 = vsyncadd [#allocation7], %s54
      %s56 = sshll.u32 [#allocation6], 4
      %s57 = int_to_ptr.vmem [resolvable:$true] %s56
      %62 = dma.hbm_to_vmem [thread:$0]  %s6, 16384, %s57, [#allocation7], 512, 512, 32
    $region29: #{tpu_custom_call.1} parent=1 // pred_fallthru
      _
    // Predicated region
    $region30: #{tpu_custom_call.1} parent=1 // pred_check
      _
    $region31: #{tpu_custom_call.1} parent=1 // pred_check_branch
      %64 = sbr.rel (0) target = $region33
    $region32: #{tpu_custom_call.1} parent=1 // pred_region
      _
    $region33: #{tpu_custom_call.1} parent=1 // pred_fallthru
      _
    // Predicated region
    $region34: #{tpu_custom_call.1} parent=1 // pred_check
      _
    $region35: #{tpu_custom_call.1} parent=1 // pred_check_branch
      %66 = sbr.rel (0) target = $region37
    $region36: #{tpu_custom_call.1} parent=1 // pred_region
      _
    $region37: #{tpu_custom_call.1} parent=1 // pred_fallthru
      _
    // Predicated region
    $region38: #{tpu_custom_call.1} parent=1 // pred_check
      _
    $region39: #{tpu_custom_call.1} parent=1 // pred_check_branch
      %68 = sbr.rel (0) target = $region41
    $region40: #{tpu_custom_call.1} parent=1 // pred_region
      %s70 = ssub.s32 2048, 2048
      %71 = vsyncadd [#allocation7], %s70
      %s72 = sshll.u32 [#allocation8], 4
      %s73 = int_to_ptr.vmem [resolvable:$true] %s72
      %78 = dma.hbm_to_vmem [thread:$0]  %s9, 2048, %s73, [#allocation7], 128, 128, 8
    $region41: #{tpu_custom_call.1} parent=1 // pred_fallthru
      _
    // Predicated region
    $region42: #{tpu_custom_call.1} parent=1 // pred_check
      _
    $region43: #{tpu_custom_call.1} parent=1 // pred_check_branch
      %80 = sbr.rel (0) target = $region45
    $region44: #{tpu_custom_call.1} parent=1 // pred_region
      %s82 = ssub.s32 2048, 2048
      %83 = vsyncadd [#allocation10], %s82
      %s84 = sshll.u32 [#allocation9], 4
      %s85 = int_to_ptr.vmem [resolvable:$true] %s84
      %90 = dma.hbm_to_vmem [thread:$0]  %s10, 2048, %s85, [#allocation10], 128, 128, 8
    $region45: #{tpu_custom_call.1} parent=1 // pred_fallthru
      _
    // Predicated region
    $region46: #{tpu_custom_call.1} parent=1 // pred_check
      _
    $region47: #{tpu_custom_call.1} parent=1 // pred_check_branch
      %92 = sbr.rel (0) target = $region49
    $region48: #{tpu_custom_call.1} parent=1 // pred_region
      %s94 = ssub.s32 4096, 4096
      %95 = vsyncadd [#allocation10], %s94
      %s96 = sshll.u32 [#allocation11], 4
      %s97 = int_to_ptr.vmem [resolvable:$true] %s96
      %102 = dma.hbm_to_vmem [thread:$0]  %s11, 4096, %s97, [#allocation10], 128, 128, 8
    $region49: #{tpu_custom_call.1} parent=1 // pred_fallthru
      _
    // Predicated region
    $region50: #{tpu_custom_call.1} parent=1 // pred_check
      _
    $region51: #{tpu_custom_call.1} parent=1 // pred_check_branch
      %104 = sbr.rel (0) target = $region53
    $region52: #{tpu_custom_call.1} parent=1 // pred_region
      _
    $region53: #{tpu_custom_call.1} parent=1 // pred_fallthru
      _
    // Predicated region
    $region54: #{tpu_custom_call.1} parent=1 // pred_check
      _
    $region55: #{tpu_custom_call.1} parent=1 // pred_check_branch
      %106 = sbr.rel (0) target = $region57
    $region56: #{tpu_custom_call.1} parent=1 // pred_region
      %s108 = ssub.s32 2048, 2048
      %109 = vsyncadd [#allocation13], %s108
      %s110 = sshll.u32 [#allocation12], 4
      %s111 = int_to_ptr.vmem [resolvable:$true] %s110
      %116 = dma.hbm_to_vmem [thread:$0]  %s13, 2048, %s111, [#allocation13], 128, 128, 8
    $region57: #{tpu_custom_call.1} parent=1 // pred_fallthru
      _
    // Predicated region
    $region58: #{tpu_custom_call.1} parent=1 // pred_check
      _
    $region59: #{tpu_custom_call.1} parent=1 // pred_check_branch
      %118 = sbr.rel (0) target = $region61
    $region60: #{tpu_custom_call.1} parent=1 // pred_region
      _
    $region61: #{tpu_custom_call.1} parent=1 // pred_fallthru
      _
    // Predicated region
    $region62: #{tpu_custom_call.1} parent=1 // pred_check
      _
    $region63: #{tpu_custom_call.1} parent=1 // pred_check_branch
      %120 = sbr.rel (0) target = $region65
    $region64: #{tpu_custom_call.1} parent=1 // pred_region
      %121 = dma.done [#allocation4], 1024
    $region65: #{tpu_custom_call.1} parent=1 // pred_fallthru
      _
    // Predicated region
    $region66: #{tpu_custom_call.1} parent=1 // pred_check
      _
    $region67: #{tpu_custom_call.1} parent=1 // pred_check_branch
      %123 = sbr.rel (0) target = $region69
    $region68: #{tpu_custom_call.1} parent=1 // pred_region
      %124 = dma.done [#allocation7], 16384
    $region69: #{tpu_custom_call.1} parent=1 // pred_fallthru
      _
    // Predicated region
    $region70: #{tpu_custom_call.1} parent=1 // pred_check
      _
    $region71: #{tpu_custom_call.1} parent=1 // pred_check_branch
      %126 = sbr.rel (0) target = $region73
    $region72: #{tpu_custom_call.1} parent=1 // pred_region
      %127 = dma.done [#allocation7], 2048
    $region73: #{tpu_custom_call.1} parent=1 // pred_fallthru
      _
    // Predicated region
    $region74: #{tpu_custom_call.1} parent=1 // pred_check
      _
    $region75: #{tpu_custom_call.1} parent=1 // pred_check_branch
      %129 = sbr.rel (0) target = $region77
    $region76: #{tpu_custom_call.1} parent=1 // pred_region
      %130 = dma.done [#allocation10], 2048
    $region77: #{tpu_custom_call.1} parent=1 // pred_fallthru
      _
    // Predicated region
    $region78: #{tpu_custom_call.1} parent=1 // pred_check
      _
    $region79: #{tpu_custom_call.1} parent=1 // pred_check_branch
      %132 = sbr.rel (0) target = $region81
    $region80: #{tpu_custom_call.1} parent=1 // pred_region
      %133 = dma.done [#allocation10], 4096
    $region81: #{tpu_custom_call.1} parent=1 // pred_fallthru
      _
    // Predicated region
    $region82: #{tpu_custom_call.1} parent=1 // pred_check
      _
    $region83: #{tpu_custom_call.1} parent=1 // pred_check_branch
      %135 = sbr.rel (0) target = $region85
    $region84: #{tpu_custom_call.1} parent=1 // pred_region
      %136 = dma.done [#allocation13], 2048
    $region85: #{tpu_custom_call.1} parent=1 // pred_fallthru
      _
    %p137 = scmp.eq.s32.totalorder 0, 0
    // Predicated region
    $region86: #{tpu_custom_call.1} parent=1 // pred_check
      %p138 = pneg %p137
    $region87: #{tpu_custom_call.1} parent=1 // pred_check_branch
      %140 = sbr.rel (%p138) target = $region89
    $region88: #{tpu_custom_call.1} parent=1 // pred_region
      %v141 = vld [vmem:[%s0] sm:$0xff]
      %v142 = vld [vmem:[%s1] sm:$0xff]
      %v143 = vld [vmem:[%s2] sm:$0xff]
      %v144 = vld [vmem:[#allocation3] sm:$0xff]
      %v145 = vld [vmem:[#allocation3 + $0x8] sm:$0xff]
      %v146 = vld [vmem:[#allocation3 + $0x10] sm:$0xff]
      %v147 = vld [vmem:[#allocation3 + $0x18] sm:$0xff]
      %v148 = vld [vmem:[#allocation3 + $0x20] sm:$0xff]
      %v149 = vld [vmem:[#allocation3 + $0x28] sm:$0xff]
      %v150 = vld [vmem:[#allocation3 + $0x30] sm:$0xff]
      %v151 = vld [vmem:[#allocation3 + $0x38] sm:$0xff]
      %v152 = vld [vmem:[#allocation6] sm:$0xff]
      %v153 = vld [vmem:[#allocation6 + $0x8] sm:$0xff]
      %v154 = vld [vmem:[#allocation6 + $0x10] sm:$0xff]
      %v155 = vld [vmem:[#allocation6 + $0x18] sm:$0xff]
      %v156 = vld [vmem:[#allocation6 + $0x20] sm:$0xff]
      %v157 = vld [vmem:[#allocation6 + $0x28] sm:$0xff]
      %v158 = vld [vmem:[#allocation6 + $0x30] sm:$0xff]
      %v159 = vld [vmem:[#allocation6 + $0x38] sm:$0xff]
      %v160 = vld [vmem:[#allocation6 + $0x40] sm:$0xff]
      %v161 = vld [vmem:[#allocation6 + $0x48] sm:$0xff]
      %v162 = vld [vmem:[#allocation6 + $0x50] sm:$0xff]
      %v163 = vld [vmem:[#allocation6 + $0x58] sm:$0xff]
      %v164 = vld [vmem:[#allocation6 + $0x60] sm:$0xff]
      %v165 = vld [vmem:[#allocation6 + $0x68] sm:$0xff]
      %v166 = vld [vmem:[#allocation6 + $0x70] sm:$0xff]
      %v167 = vld [vmem:[#allocation6 + $0x78] sm:$0xff]
      %v168 = vld [vmem:[#allocation6 + $0x80] sm:$0xff]
      %v169 = vld [vmem:[#allocation6 + $0x88] sm:$0xff]
      %v170 = vld [vmem:[#allocation6 + $0x90] sm:$0xff]
      %v171 = vld [vmem:[#allocation6 + $0x98] sm:$0xff]
      %v172 = vld [vmem:[#allocation6 + $0xa0] sm:$0xff]
      %v173 = vld [vmem:[#allocation6 + $0xa8] sm:$0xff]
      %v174 = vld [vmem:[#allocation6 + $0xb0] sm:$0xff]
      %v175 = vld [vmem:[#allocation6 + $0xb8] sm:$0xff]
      %v176 = vld [vmem:[#allocation6 + $0xc0] sm:$0xff]
      %v177 = vld [vmem:[#allocation6 + $0xc8] sm:$0xff]
      %v178 = vld [vmem:[#allocation6 + $0xd0] sm:$0xff]
      %v179 = vld [vmem:[#allocation6 + $0xd8] sm:$0xff]
      %v180 = vld [vmem:[#allocation6 + $0xe0] sm:$0xff]
      %v181 = vld [vmem:[#allocation6 + $0xe8] sm:$0xff]
      %v182 = vld [vmem:[#allocation6 + $0xf0] sm:$0xff]
      %v183 = vld [vmem:[#allocation6 + $0xf8] sm:$0xff]
      %v184 = vld [vmem:[#allocation6 + $0x100] sm:$0xff]
      %v185 = vld [vmem:[#allocation6 + $0x108] sm:$0xff]
      %v186 = vld [vmem:[#allocation6 + $0x110] sm:$0xff]
      %v187 = vld [vmem:[#allocation6 + $0x118] sm:$0xff]
      %v188 = vld [vmem:[#allocation6 + $0x120] sm:$0xff]
      %v189 = vld [vmem:[#allocation6 + $0x128] sm:$0xff]
      %v190 = vld [vmem:[#allocation6 + $0x130] sm:$0xff]
      %v191 = vld [vmem:[#allocation6 + $0x138] sm:$0xff]
      %v192 = vld [vmem:[#allocation6 + $0x140] sm:$0xff]
      %v193 = vld [vmem:[#allocation6 + $0x148] sm:$0xff]
      %v194 = vld [vmem:[#allocation6 + $0x150] sm:$0xff]
      %v195 = vld [vmem:[#allocation6 + $0x158] sm:$0xff]
      %v196 = vld [vmem:[#allocation6 + $0x160] sm:$0xff]
      %v197 = vld [vmem:[#allocation6 + $0x168] sm:$0xff]
      %v198 = vld [vmem:[#allocation6 + $0x170] sm:$0xff]
      %v199 = vld [vmem:[#allocation6 + $0x178] sm:$0xff]
      %v200 = vld [vmem:[#allocation6 + $0x180] sm:$0xff]
      %v201 = vld [vmem:[#allocation6 + $0x188] sm:$0xff]
      %v202 = vld [vmem:[#allocation6 + $0x190] sm:$0xff]
      %v203 = vld [vmem:[#allocation6 + $0x198] sm:$0xff]
      %v204 = vld [vmem:[#allocation6 + $0x1a0] sm:$0xff]
      %v205 = vld [vmem:[#allocation6 + $0x1a8] sm:$0xff]
      %v206 = vld [vmem:[#allocation6 + $0x1b0] sm:$0xff]
      %v207 = vld [vmem:[#allocation6 + $0x1b8] sm:$0xff]
      %v208 = vld [vmem:[#allocation6 + $0x1c0] sm:$0xff]
      %v209 = vld [vmem:[#allocation6 + $0x1c8] sm:$0xff]
      %v210 = vld [vmem:[#allocation6 + $0x1d0] sm:$0xff]
      %v211 = vld [vmem:[#allocation6 + $0x1d8] sm:$0xff]
      %v212 = vld [vmem:[#allocation6 + $0x1e0] sm:$0xff]
      %v213 = vld [vmem:[#allocation6 + $0x1e8] sm:$0xff]
      %v214 = vld [vmem:[#allocation6 + $0x1f0] sm:$0xff]
      %v215 = vld [vmem:[#allocation6 + $0x1f8] sm:$0xff]
      %v216 = vld [vmem:[#allocation6 + $0x200] sm:$0xff]
      %v217 = vld [vmem:[#allocation6 + $0x208] sm:$0xff]
      %v218 = vld [vmem:[#allocation6 + $0x210] sm:$0xff]
      %v219 = vld [vmem:[#allocation6 + $0x218] sm:$0xff]
      %v220 = vld [vmem:[#allocation6 + $0x220] sm:$0xff]
      %v221 = vld [vmem:[#allocation6 + $0x228] sm:$0xff]
      %v222 = vld [vmem:[#allocation6 + $0x230] sm:$0xff]
      %v223 = vld [vmem:[#allocation6 + $0x238] sm:$0xff]
      %v224 = vld [vmem:[#allocation6 + $0x240] sm:$0xff]
      %v225 = vld [vmem:[#allocation6 + $0x248] sm:$0xff]
      %v226 = vld [vmem:[#allocation6 + $0x250] sm:$0xff]
      %v227 = vld [vmem:[#allocation6 + $0x258] sm:$0xff]
      %v228 = vld [vmem:[#allocation6 + $0x260] sm:$0xff]
      %v229 = vld [vmem:[#allocation6 + $0x268] sm:$0xff]
      %v230 = vld [vmem:[#allocation6 + $0x270] sm:$0xff]
      %v231 = vld [vmem:[#allocation6 + $0x278] sm:$0xff]
      %v232 = vld [vmem:[#allocation6 + $0x280] sm:$0xff]
      %v233 = vld [vmem:[#allocation6 + $0x288] sm:$0xff]
      %v234 = vld [vmem:[#allocation6 + $0x290] sm:$0xff]
      %v235 = vld [vmem:[#allocation6 + $0x298] sm:$0xff]
      %v236 = vld [vmem:[#allocation6 + $0x2a0] sm:$0xff]
      %v237 = vld [vmem:[#allocation6 + $0x2a8] sm:$0xff]
      %v238 = vld [vmem:[#allocation6 + $0x2b0] sm:$0xff]
      %v239 = vld [vmem:[#allocation6 + $0x2b8] sm:$0xff]
      %v240 = vld [vmem:[#allocation6 + $0x2c0] sm:$0xff]
      %v241 = vld [vmem:[#allocation6 + $0x2c8] sm:$0xff]
      %v242 = vld [vmem:[#allocation6 + $0x2d0] sm:$0xff]
      %v243 = vld [vmem:[#allocation6 + $0x2d8] sm:$0xff]
      %v244 = vld [vmem:[#allocation6 + $0x2e0] sm:$0xff]
      %v245 = vld [vmem:[#allocation6 + $0x2e8] sm:$0xff]
      %v246 = vld [vmem:[#allocation6 + $0x2f0] sm:$0xff]
      %v247 = vld [vmem:[#allocation6 + $0x2f8] sm:$0xff]
      %v248 = vld [vmem:[#allocation6 + $0x300] sm:$0xff]
      %v249 = vld [vmem:[#allocation6 + $0x308] sm:$0xff]
      %v250 = vld [vmem:[#allocation6 + $0x310] sm:$0xff]
      %v251 = vld [vmem:[#allocation6 + $0x318] sm:$0xff]
      %v252 = vld [vmem:[#allocation6 + $0x320] sm:$0xff]
      %v253 = vld [vmem:[#allocation6 + $0x328] sm:$0xff]
      %v254 = vld [vmem:[#allocation6 + $0x330] sm:$0xff]
      %v255 = vld [vmem:[#allocation6 + $0x338] sm:$0xff]
      %v256 = vld [vmem:[#allocation6 + $0x340] sm:$0xff]
      %v257 = vld [vmem:[#allocation6 + $0x348] sm:$0xff]
      %v258 = vld [vmem:[#allocation6 + $0x350] sm:$0xff]
      %v259 = vld [vmem:[#allocation6 + $0x358] sm:$0xff]
      %v260 = vld [vmem:[#allocation6 + $0x360] sm:$0xff]
      %v261 = vld [vmem:[#allocation6 + $0x368] sm:$0xff]
      %v262 = vld [vmem:[#allocation6 + $0x370] sm:$0xff]
      %v263 = vld [vmem:[#allocation6 + $0x378] sm:$0xff]
      %v264 = vld [vmem:[#allocation6 + $0x380] sm:$0xff]
      %v265 = vld [vmem:[#allocation6 + $0x388] sm:$0xff]
      %v266 = vld [vmem:[#allocation6 + $0x390] sm:$0xff]
      %v267 = vld [vmem:[#allocation6 + $0x398] sm:$0xff]
      %v268 = vld [vmem:[#allocation6 + $0x3a0] sm:$0xff]
      %v269 = vld [vmem:[#allocation6 + $0x3a8] sm:$0xff]
      %v270 = vld [vmem:[#allocation6 + $0x3b0] sm:$0xff]
      %v271 = vld [vmem:[#allocation6 + $0x3b8] sm:$0xff]
      %v272 = vld [vmem:[#allocation6 + $0x3c0] sm:$0xff]
      %v273 = vld [vmem:[#allocation6 + $0x3c8] sm:$0xff]
      %v274 = vld [vmem:[#allocation6 + $0x3d0] sm:$0xff]
      %v275 = vld [vmem:[#allocation6 + $0x3d8] sm:$0xff]
      %v276 = vld [vmem:[#allocation6 + $0x3e0] sm:$0xff]
      %v277 = vld [vmem:[#allocation6 + $0x3e8] sm:$0xff]
      %v278 = vld [vmem:[#allocation6 + $0x3f0] sm:$0xff]
      %v279 = vld [vmem:[#allocation6 + $0x3f8] sm:$0xff]
      %v280 = vld [vmem:[%s7] sm:$0xf]
      %v282 = vlaneseq
      %v283 = vshrl.u32 %v282, 7
      %v284 = vsub.s32 0, %v283
      %v285 = vrot.slane %v280, %v284
      %v286 = vlaneseq
      %v287 = vshrl.u32 %v286, 7
      %v288 = vsub.s32 1, %v287
      %v289 = vrot.slane %v280, %v288
      %v290 = vlaneseq
      %v291 = vshrl.u32 %v290, 7
      %v292 = vsub.s32 2, %v291
      %v293 = vrot.slane %v280, %v292
      %v294 = vlaneseq
      %v295 = vshrl.u32 %v294, 7
      %v296 = vsub.s32 3, %v295
      %v297 = vrot.slane %v280, %v296
      %302 = vmatprep.subr.mxu0 %v213
      %303 = vmatpush1.msra.mxu0 %v212
      %304 = vmatprep.subr.mxu0 %v209
      %305 = vmatpush1.msra.mxu0 %v208
      %306 = vmatprep.subr.mxu0 %v205
      %307 = vmatpush1.msra.mxu0 %v204
      %308 = vmatprep.subr.mxu0 %v201
      %309 = vmatpush1.msra.mxu0 %v200
      %310 = vmatprep.subr.mxu0 %v197
      %311 = vmatpush1.msra.mxu0 %v196
      %312 = vmatprep.subr.mxu0 %v193
      %313 = vmatpush1.msra.mxu0 %v192
      %314 = vmatprep.subr.mxu0 %v189
      %315 = vmatpush1.msra.mxu0 %v188
      %316 = vmatprep.subr.mxu0 %v185
      %317 = vmatpush1.msra.mxu0 %v184
      %318 = vmatprep.subr.mxu0 %v181
      %319 = vmatpush1.msra.mxu0 %v180
      %320 = vmatprep.subr.mxu0 %v177
      %321 = vmatpush1.msra.mxu0 %v176
      %322 = vmatprep.subr.mxu0 %v173
      %323 = vmatpush1.msra.mxu0 %v172
      %324 = vmatprep.subr.mxu0 %v169
      %325 = vmatpush1.msra.mxu0 %v168
      %326 = vmatprep.subr.mxu0 %v165
      %327 = vmatpush1.msra.mxu0 %v164
      %328 = vmatprep.subr.mxu0 %v161
      %329 = vmatpush1.msra.mxu0 %v160
      %330 = vmatprep.subr.mxu0 %v157
      %331 = vmatpush1.msra.mxu0 %v156
      %332 = vmatprep.subr.mxu0 %v153
      %333 = vmatpush1.msra.mxu0 %v152
      %334 = vmatprep.subr.mxu0 %v277
      %335 = vmatpush2.msra.mxu0 %v276
      %336 = vmatprep.subr.mxu0 %v273
      %337 = vmatpush2.msra.mxu0 %v272
      %338 = vmatprep.subr.mxu0 %v269
      %339 = vmatpush2.msra.mxu0 %v268
      %340 = vmatprep.subr.mxu0 %v265
      %341 = vmatpush2.msra.mxu0 %v264
      %342 = vmatprep.subr.mxu0 %v261
      %343 = vmatpush2.msra.mxu0 %v260
      %344 = vmatprep.subr.mxu0 %v257
      %345 = vmatpush2.msra.mxu0 %v256
      %346 = vmatprep.subr.mxu0 %v253
      %347 = vmatpush2.msra.mxu0 %v252
      %348 = vmatprep.subr.mxu0 %v249
      %349 = vmatpush2.msra.mxu0 %v248
      %350 = vmatprep.subr.mxu0 %v245
      %351 = vmatpush2.msra.mxu0 %v244
      %352 = vmatprep.subr.mxu0 %v241
      %353 = vmatpush2.msra.mxu0 %v240
      %354 = vmatprep.subr.mxu0 %v237
      %355 = vmatpush2.msra.mxu0 %v236
      %356 = vmatprep.subr.mxu0 %v233
      %357 = vmatpush2.msra.mxu0 %v232
      %358 = vmatprep.subr.mxu0 %v229
      %359 = vmatpush2.msra.mxu0 %v228
      %360 = vmatprep.subr.mxu0 %v225
      %361 = vmatpush2.msra.mxu0 %v224
      %362 = vmatprep.subr.mxu0 %v221
      %363 = vmatpush2.msra.mxu0 %v220
      %364 = vmatprep.subr.mxu0 %v217
      %365 = vmatpush2.msra.mxu0 %v216
      %366 = vmatprep.mubr.f32.mxu0 %v142
      %367 = vmatmul.mubr.f32.gmra.mxu0 %v141
      %v368 = vpop.f32.mrf.mxu0
      %v369 = vadd.f32 %v285, %v368
      %v370 = vpop.f32.mrf.mxu0
      %v371 = vadd.f32 %v289, %v370
      %372 = vdwg.mxu0
      %373 = vmatprep.subr.mxu0 %v215
      %374 = vmatpush1.msra.mxu0 %v214
      %375 = vmatprep.subr.mxu0 %v211
      %376 = vmatpush1.msra.mxu0 %v210
      %377 = vmatprep.subr.mxu0 %v207
      %378 = vmatpush1.msra.mxu0 %v206
      %379 = vmatprep.subr.mxu0 %v203
      %380 = vmatpush1.msra.mxu0 %v202
      %381 = vmatprep.subr.mxu0 %v199
      %382 = vmatpush1.msra.mxu0 %v198
      %383 = vmatprep.subr.mxu0 %v195
      %384 = vmatpush1.msra.mxu0 %v194
      %385 = vmatprep.subr.mxu0 %v191
      %386 = vmatpush1.msra.mxu0 %v190
      %387 = vmatprep.subr.mxu0 %v187
      %388 = vmatpush1.msra.mxu0 %v186
      %389 = vmatprep.subr.mxu0 %v183
      %390 = vmatpush1.msra.mxu0 %v182
      %391 = vmatprep.subr.mxu0 %v179
      %392 = vmatpush1.msra.mxu0 %v178
      %393 = vmatprep.subr.mxu0 %v175
      %394 = vmatpush1.msra.mxu0 %v174
      %395 = vmatprep.subr.mxu0 %v171
      %396 = vmatpush1.msra.mxu0 %v170
      %397 = vmatprep.subr.mxu0 %v167
      %398 = vmatpush1.msra.mxu0 %v166
      %399 = vmatprep.subr.mxu0 %v163
      %400 = vmatpush1.msra.mxu0 %v162
      %401 = vmatprep.subr.mxu0 %v159
      %402 = vmatpush1.msra.mxu0 %v158
      %403 = vmatprep.subr.mxu0 %v155
      %404 = vmatpush1.msra.mxu0 %v154
      %405 = vmatprep.subr.mxu0 %v279
      %406 = vmatpush2.msra.mxu0 %v278
      %407 = vmatprep.subr.mxu0 %v275
      %408 = vmatpush2.msra.mxu0 %v274
      %409 = vmatprep.subr.mxu0 %v271
      %410 = vmatpush2.msra.mxu0 %v270
      %411 = vmatprep.subr.mxu0 %v267
      %412 = vmatpush2.msra.mxu0 %v266
      %413 = vmatprep.subr.mxu0 %v263
      %414 = vmatpush2.msra.mxu0 %v262
      %415 = vmatprep.subr.mxu0 %v259
      %416 = vmatpush2.msra.mxu0 %v258
      %417 = vmatprep.subr.mxu0 %v255
      %418 = vmatpush2.msra.mxu0 %v254
      %419 = vmatprep.subr.mxu0 %v251
      %420 = vmatpush2.msra.mxu0 %v250
      %421 = vmatprep.subr.mxu0 %v247
      %422 = vmatpush2.msra.mxu0 %v246
      %423 = vmatprep.subr.mxu0 %v243
      %424 = vmatpush2.msra.mxu0 %v242
      %425 = vmatprep.subr.mxu0 %v239
      %426 = vmatpush2.msra.mxu0 %v238
      %427 = vmatprep.subr.mxu0 %v235
      %428 = vmatpush2.msra.mxu0 %v234
      %429 = vmatprep.subr.mxu0 %v231
      %430 = vmatpush2.msra.mxu0 %v230
      %431 = vmatprep.subr.mxu0 %v227
      %432 = vmatpush2.msra.mxu0 %v226
      %433 = vmatprep.subr.mxu0 %v223
      %434 = vmatpush2.msra.mxu0 %v222
      %435 = vmatprep.subr.mxu0 %v219
      %436 = vmatpush2.msra.mxu0 %v218
      %437 = vmatprep.mubr.f32.mxu0 %v142
      %438 = vmatmul.mubr.f32.gmra.mxu0 %v141
      %v439 = vpop.f32.mrf.mxu0
      %v440 = vadd.f32 %v293, %v439
      %v441 = vpop.f32.mrf.mxu0
      %v442 = vadd.f32 %v297, %v441
      %443 = vdwg.mxu0
      %v444 = vxor.u32 %v369, 2147483648
      %v445 = vmul.f32 %v444, 1.442695
      %v446 = vpow.pop %v445
      %v447 = vadd.f32 %v446, 1.0
      %v448 = vrcp.pop %v447
      %v449 = vmul.f32 1.0, %v448
      %v450 = vxor.u32 %v371, 2147483648
      %v451 = vmul.f32 %v450, 1.442695
      %v452 = vpow.pop %v451
      %v453 = vadd.f32 %v452, 1.0
      %v454 = vrcp.pop %v453
      %v455 = vmul.f32 1.0, %v454
      %v456 = vtanh.pop %v440
      %v457 = vxor.u32 %v442, 2147483648
      %v458 = vmul.f32 %v457, 1.442695
      %v459 = vpow.pop %v458
      %v460 = vadd.f32 %v459, 1.0
      %v461 = vrcp.pop %v460
      %v462 = vmul.f32 1.0, %v461
      %v463 = vmul.f32 %v455, %v143
      %v464 = vmul.f32 %v449, %v456
      %v465 = vadd.f32 %v463, %v464
      %v466 = vtanh.pop %v465
      %v467 = vmul.f32 %v462, %v466
      %v468 = vld [vmem:[%s8] sm:$0xff]
      %v469 = vld [vmem:[%s8 + $0x8] sm:$0xff]
      %v470 = vld [vmem:[%s8 + $0x10] sm:$0xff]
      %v471 = vld [vmem:[%s8 + $0x18] sm:$0xff]
      %v472 = vld [vmem:[%s8 + $0x20] sm:$0xff]
      %v473 = vld [vmem:[%s8 + $0x28] sm:$0xff]
      %v474 = vld [vmem:[%s8 + $0x30] sm:$0xff]
      %v475 = vld [vmem:[%s8 + $0x38] sm:$0xff]
      %v476 = vld [vmem:[%s8 + $0x40] sm:$0xff]
      %v477 = vld [vmem:[%s8 + $0x48] sm:$0xff]
      %v478 = vld [vmem:[%s8 + $0x50] sm:$0xff]
      %v479 = vld [vmem:[%s8 + $0x58] sm:$0xff]
      %v480 = vld [vmem:[%s8 + $0x60] sm:$0xff]
      %v481 = vld [vmem:[%s8 + $0x68] sm:$0xff]
      %v482 = vld [vmem:[%s8 + $0x70] sm:$0xff]
      %v483 = vld [vmem:[%s8 + $0x78] sm:$0xff]
      %484 = vmatprep.subr.mxu0 0.0
      %485 = vmatpush1.msra.mxu0 %v483
      %486 = vmatprep.subr.mxu0 0.0
      %487 = vmatpush1.msra.mxu0 %v482
      %488 = vmatprep.subr.mxu0 0.0
      %489 = vmatpush1.msra.mxu0 %v481
      %490 = vmatprep.subr.mxu0 0.0
      %491 = vmatpush1.msra.mxu0 %v480
      %492 = vmatprep.subr.mxu0 0.0
      %493 = vmatpush1.msra.mxu0 %v479
      %494 = vmatprep.subr.mxu0 0.0
      %495 = vmatpush1.msra.mxu0 %v478
      %496 = vmatprep.subr.mxu0 0.0
      %497 = vmatpush1.msra.mxu0 %v477
      %498 = vmatprep.subr.mxu0 0.0
      %499 = vmatpush1.msra.mxu0 %v476
      %500 = vmatprep.subr.mxu0 0.0
      %501 = vmatpush1.msra.mxu0 %v475
      %502 = vmatprep.subr.mxu0 0.0
      %503 = vmatpush1.msra.mxu0 %v474
      %504 = vmatprep.subr.mxu0 0.0
      %505 = vmatpush1.msra.mxu0 %v473
      %506 = vmatprep.subr.mxu0 0.0
      %507 = vmatpush1.msra.mxu0 %v472
      %508 = vmatprep.subr.mxu0 0.0
      %509 = vmatpush1.msra.mxu0 %v471
      %510 = vmatprep.subr.mxu0 0.0
      %511 = vmatpush1.msra.mxu0 %v470
      %512 = vmatprep.subr.mxu0 0.0
      %513 = vmatpush1.msra.mxu0 %v469
      %514 = vmatprep.subr.mxu0 0.0
      %515 = vmatpush1.msra.mxu0 %v468
      %516 = vmatprep.subr.mxu0 0.0
      %517 = vmatpush2.msra.mxu0 0.0
      %518 = vmatprep.subr.mxu0 0.0
      %519 = vmatpush2.msra.mxu0 0.0
      %520 = vmatprep.subr.mxu0 0.0
      %521 = vmatpush2.msra.mxu0 0.0
      %522 = vmatprep.subr.mxu0 0.0
      %523 = vmatpush2.msra.mxu0 0.0
      %524 = vmatprep.subr.mxu0 0.0
      %525 = vmatpush2.msra.mxu0 0.0
      %526 = vmatprep.subr.mxu0 0.0
      %527 = vmatpush2.msra.mxu0 0.0
      %528 = vmatprep.subr.mxu0 0.0
      %529 = vmatpush2.msra.mxu0 0.0
      %530 = vmatprep.subr.mxu0 0.0
      %531 = vmatpush2.msra.mxu0 0.0
      %532 = vmatprep.subr.mxu0 0.0
      %533 = vmatpush2.msra.mxu0 0.0
      %534 = vmatprep.subr.mxu0 0.0
      %535 = vmatpush2.msra.mxu0 0.0
      %536 = vmatprep.subr.mxu0 0.0
      %537 = vmatpush2.msra.mxu0 0.0
      %538 = vmatprep.subr.mxu0 0.0
      %539 = vmatpush2.msra.mxu0 0.0
      %540 = vmatprep.subr.mxu0 0.0
      %541 = vmatpush2.msra.mxu0 0.0
      %542 = vmatprep.subr.mxu0 0.0
      %543 = vmatpush2.msra.mxu0 0.0
      %544 = vmatprep.subr.mxu0 0.0
      %545 = vmatpush2.msra.mxu0 0.0
      %546 = vmatprep.subr.mxu0 0.0
      %547 = vmatpush2.msra.mxu0 0.0
      %548 = vmatprep.mubr.f32.mxu0 0.0
      %549 = vmatmul.mubr.f32.gmra.mxu0 %v467
      %v550 = vpop.f32.mrf.mxu0
      %v551 = vadd.f32 0.0, %v550
      %v552 = vpop.f32.mrf.mxu0
      %553 = vdwg.mxu0
      %v554 = vld [vmem:[#allocation8] sm:$0xff]
      %v555 = vld [vmem:[#allocation8 + $0x8] sm:$0xff]
      %v556 = vld [vmem:[#allocation8 + $0x10] sm:$0xff]
      %v557 = vld [vmem:[#allocation8 + $0x18] sm:$0xff]
      %v558 = vld [vmem:[#allocation8 + $0x20] sm:$0xff]
      %v559 = vld [vmem:[#allocation8 + $0x28] sm:$0xff]
      %v560 = vld [vmem:[#allocation8 + $0x30] sm:$0xff]
      %v561 = vld [vmem:[#allocation8 + $0x38] sm:$0xff]
      %v562 = vld [vmem:[#allocation8 + $0x40] sm:$0xff]
      %v563 = vld [vmem:[#allocation8 + $0x48] sm:$0xff]
      %v564 = vld [vmem:[#allocation8 + $0x50] sm:$0xff]
      %v565 = vld [vmem:[#allocation8 + $0x58] sm:$0xff]
      %v566 = vld [vmem:[#allocation8 + $0x60] sm:$0xff]
      %v567 = vld [vmem:[#allocation8 + $0x68] sm:$0xff]
      %v568 = vld [vmem:[#allocation8 + $0x70] sm:$0xff]
      %v569 = vld [vmem:[#allocation8 + $0x78] sm:$0xff]
      %570 = vmatprep.subr.mxu0 0.0
      %571 = vmatpush1.msra.mxu0 %v569
      %572 = vmatprep.subr.mxu0 0.0
      %573 = vmatpush1.msra.mxu0 %v568
      %574 = vmatprep.subr.mxu0 0.0
      %575 = vmatpush1.msra.mxu0 %v567
      %576 = vmatprep.subr.mxu0 0.0
      %577 = vmatpush1.msra.mxu0 %v566
      %578 = vmatprep.subr.mxu0 0.0
      %579 = vmatpush1.msra.mxu0 %v565
      %580 = vmatprep.subr.mxu0 0.0
      %581 = vmatpush1.msra.mxu0 %v564
      %582 = vmatprep.subr.mxu0 0.0
      %583 = vmatpush1.msra.mxu0 %v563
      %584 = vmatprep.subr.mxu0 0.0
      %585 = vmatpush1.msra.mxu0 %v562
      %586 = vmatprep.subr.mxu0 0.0
      %587 = vmatpush1.msra.mxu0 %v561
      %588 = vmatprep.subr.mxu0 0.0
      %589 = vmatpush1.msra.mxu0 %v560
      %590 = vmatprep.subr.mxu0 0.0
      %591 = vmatpush1.msra.mxu0 %v559
      %592 = vmatprep.subr.mxu0 0.0
      %593 = vmatpush1.msra.mxu0 %v558
      %594 = vmatprep.subr.mxu0 0.0
      %595 = vmatpush1.msra.mxu0 %v557
      %596 = vmatprep.subr.mxu0 0.0
      %597 = vmatpush1.msra.mxu0 %v556
      %598 = vmatprep.subr.mxu0 0.0
      %599 = vmatpush1.msra.mxu0 %v555
      %600 = vmatprep.subr.mxu0 0.0
      %601 = vmatpush1.msra.mxu0 %v554
      %602 = vmatprep.subr.mxu0 0.0
      %603 = vmatpush2.msra.mxu0 0.0
      %604 = vmatprep.subr.mxu0 0.0
      %605 = vmatpush2.msra.mxu0 0.0
      %606 = vmatprep.subr.mxu0 0.0
      %607 = vmatpush2.msra.mxu0 0.0
      %608 = vmatprep.subr.mxu0 0.0
      %609 = vmatpush2.msra.mxu0 0.0
      %610 = vmatprep.subr.mxu0 0.0
      %611 = vmatpush2.msra.mxu0 0.0
      %612 = vmatprep.subr.mxu0 0.0
      %613 = vmatpush2.msra.mxu0 0.0
      %614 = vmatprep.subr.mxu0 0.0
      %615 = vmatpush2.msra.mxu0 0.0
      %616 = vmatprep.subr.mxu0 0.0
      %617 = vmatpush2.msra.mxu0 0.0
      %618 = vmatprep.subr.mxu0 0.0
      %619 = vmatpush2.msra.mxu0 0.0
      %620 = vmatprep.subr.mxu0 0.0
      %621 = vmatpush2.msra.mxu0 0.0
      %622 = vmatprep.subr.mxu0 0.0
      %623 = vmatpush2.msra.mxu0 0.0
      %624 = vmatprep.subr.mxu0 0.0
      %625 = vmatpush2.msra.mxu0 0.0
      %626 = vmatprep.subr.mxu0 0.0
      %627 = vmatpush2.msra.mxu0 0.0
      %628 = vmatprep.subr.mxu0 0.0
      %629 = vmatpush2.msra.mxu0 0.0
      %630 = vmatprep.subr.mxu0 0.0
      %631 = vmatpush2.msra.mxu0 0.0
      %632 = vmatprep.subr.mxu0 0.0
      %633 = vmatpush2.msra.mxu0 0.0
      %634 = vmatprep.mubr.f32.mxu0 0.0
      %635 = vmatmul.mubr.f32.gmra.mxu0 %v144
      %v636 = vpop.f32.mrf.mxu0
      %v637 = vadd.f32 0.0, %v636
      %v638 = vpop.f32.mrf.mxu0
      %639 = vmatprep.mubr.f32.mxu0 0.0
      %640 = vmatmul.mubr.f32.gmra.mxu0 %v145
      %v641 = vpop.f32.mrf.mxu0
      %v642 = vadd.f32 0.0, %v641
      %v643 = vpop.f32.mrf.mxu0
      %644 = vmatprep.mubr.f32.mxu0 0.0
      %645 = vmatmul.mubr.f32.gmra.mxu0 %v146
      %v646 = vpop.f32.mrf.mxu0
      %v647 = vadd.f32 0.0, %v646
      %v648 = vpop.f32.mrf.mxu0
      %649 = vmatprep.mubr.f32.mxu0 0.0
      %650 = vmatmul.mubr.f32.gmra.mxu0 %v147
      %v651 = vpop.f32.mrf.mxu0
      %v652 = vadd.f32 0.0, %v651
      %v653 = vpop.f32.mrf.mxu0
      %654 = vmatprep.mubr.f32.mxu0 0.0
      %655 = vmatmul.mubr.f32.gmra.mxu0 %v148
      %v656 = vpop.f32.mrf.mxu0
      %v657 = vadd.f32 0.0, %v656
      %v658 = vpop.f32.mrf.mxu0
      %659 = vmatprep.mubr.f32.mxu0 0.0
      %660 = vmatmul.mubr.f32.gmra.mxu0 %v149
      %v661 = vpop.f32.mrf.mxu0
      %v662 = vadd.f32 0.0, %v661
      %v663 = vpop.f32.mrf.mxu0
      %664 = vmatprep.mubr.f32.mxu0 0.0
      %665 = vmatmul.mubr.f32.gmra.mxu0 %v150
      %v666 = vpop.f32.mrf.mxu0
      %v667 = vadd.f32 0.0, %v666
      %v668 = vpop.f32.mrf.mxu0
      %669 = vmatprep.mubr.f32.mxu0 0.0
      %670 = vmatmul.mubr.f32.gmra.mxu0 %v151
      %v671 = vpop.f32.mrf.mxu0
      %v672 = vadd.f32 0.0, %v671
      %v673 = vpop.f32.mrf.mxu0
      %674 = vdwg.mxu0
      %v675 = vadd.f32 %v551, %v637
      %v676 = vadd.f32 %v551, %v642
      %v677 = vadd.f32 %v551, %v647
      %v678 = vadd.f32 %v551, %v652
      %v679 = vadd.f32 %v551, %v657
      %v680 = vadd.f32 %v551, %v662
      %v681 = vadd.f32 %v551, %v667
      %v682 = vadd.f32 %v551, %v672
      %v683 = vtanh.pop %v675
      %v684 = vtanh.pop %v676
      %v685 = vtanh.pop %v677
      %v686 = vtanh.pop %v678
      %v687 = vtanh.pop %v679
      %v688 = vtanh.pop %v680
      %v689 = vtanh.pop %v681
      %v690 = vtanh.pop %v682
      %v691 = vld [vmem:[#allocation9] sm:$0xff]
      %v692 = vld [vmem:[#allocation9 + $0x8] sm:$0xff]
      %v693 = vld [vmem:[#allocation9 + $0x10] sm:$0xff]
      %v694 = vld [vmem:[#allocation9 + $0x18] sm:$0xff]
      %v695 = vld [vmem:[#allocation9 + $0x20] sm:$0xff]
      %v696 = vld [vmem:[#allocation9 + $0x28] sm:$0xff]
      %v697 = vld [vmem:[#allocation9 + $0x30] sm:$0xff]
      %v698 = vld [vmem:[#allocation9 + $0x38] sm:$0xff]
      %v699 = vld [vmem:[#allocation9 + $0x40] sm:$0xff]
      %v700 = vld [vmem:[#allocation9 + $0x48] sm:$0xff]
      %v701 = vld [vmem:[#allocation9 + $0x50] sm:$0xff]
      %v702 = vld [vmem:[#allocation9 + $0x58] sm:$0xff]
      %v703 = vld [vmem:[#allocation9 + $0x60] sm:$0xff]
      %v704 = vld [vmem:[#allocation9 + $0x68] sm:$0xff]
      %v705 = vld [vmem:[#allocation9 + $0x70] sm:$0xff]
      %v706 = vld [vmem:[#allocation9 + $0x78] sm:$0xff]
      %707 = vmatprep.subr.mxu0 0.0
      %708 = vmatpush1.msra.mxu0 %v706
      %709 = vmatprep.subr.mxu0 0.0
      %710 = vmatpush1.msra.mxu0 %v705
      %711 = vmatprep.subr.mxu0 0.0
      %712 = vmatpush1.msra.mxu0 %v704
      %713 = vmatprep.subr.mxu0 0.0
      %714 = vmatpush1.msra.mxu0 %v703
      %715 = vmatprep.subr.mxu0 0.0
      %716 = vmatpush1.msra.mxu0 %v702
      %717 = vmatprep.subr.mxu0 0.0
      %718 = vmatpush1.msra.mxu0 %v701
      %719 = vmatprep.subr.mxu0 0.0
      %720 = vmatpush1.msra.mxu0 %v700
      %721 = vmatprep.subr.mxu0 0.0
      %722 = vmatpush1.msra.mxu0 %v699
      %723 = vmatprep.subr.mxu0 0.0
      %724 = vmatpush1.msra.mxu0 %v698
      %725 = vmatprep.subr.mxu0 0.0
      %726 = vmatpush1.msra.mxu0 %v697
      %727 = vmatprep.subr.mxu0 0.0
      %728 = vmatpush1.msra.mxu0 %v696
      %729 = vmatprep.subr.mxu0 0.0
      %730 = vmatpush1.msra.mxu0 %v695
      %731 = vmatprep.subr.mxu0 0.0
      %732 = vmatpush1.msra.mxu0 %v694
      %733 = vmatprep.subr.mxu0 0.0
      %734 = vmatpush1.msra.mxu0 %v693
      %735 = vmatprep.subr.mxu0 0.0
      %736 = vmatpush1.msra.mxu0 %v692
      %737 = vmatprep.subr.mxu0 0.0
      %738 = vmatpush1.msra.mxu0 %v691
      %739 = vmatprep.subr.mxu0 0.0
      %740 = vmatpush2.msra.mxu0 0.0
      %741 = vmatprep.subr.mxu0 0.0
      %742 = vmatpush2.msra.mxu0 0.0
      %743 = vmatprep.subr.mxu0 0.0
      %744 = vmatpush2.msra.mxu0 0.0
      %745 = vmatprep.subr.mxu0 0.0
      %746 = vmatpush2.msra.mxu0 0.0
      %747 = vmatprep.subr.mxu0 0.0
      %748 = vmatpush2.msra.mxu0 0.0
      %749 = vmatprep.subr.mxu0 0.0
      %750 = vmatpush2.msra.mxu0 0.0
      %751 = vmatprep.subr.mxu0 0.0
      %752 = vmatpush2.msra.mxu0 0.0
      %753 = vmatprep.subr.mxu0 0.0
      %754 = vmatpush2.msra.mxu0 0.0
      %755 = vmatprep.subr.mxu0 0.0
      %756 = vmatpush2.msra.mxu0 0.0
      %757 = vmatprep.subr.mxu0 0.0
      %758 = vmatpush2.msra.mxu0 0.0
      %759 = vmatprep.subr.mxu0 0.0
      %760 = vmatpush2.msra.mxu0 0.0
      %761 = vmatprep.subr.mxu0 0.0
      %762 = vmatpush2.msra.mxu0 0.0
      %763 = vmatprep.subr.mxu0 0.0
      %764 = vmatpush2.msra.mxu0 0.0
      %765 = vmatprep.subr.mxu0 0.0
      %766 = vmatpush2.msra.mxu0 0.0
      %767 = vmatprep.subr.mxu0 0.0
      %768 = vmatpush2.msra.mxu0 0.0
      %769 = vmatprep.subr.mxu0 0.0
      %770 = vmatpush2.msra.mxu0 0.0
      %771 = vmatprep.mubr.f32.mxu0 0.0
      %772 = vmatmul.mubr.f32.gmra.mxu0 %v683
      %v773 = vpop.f32.mrf.mxu0
      %v774 = vadd.f32 0.0, %v773
      %v775 = vpop.f32.mrf.mxu0
      %776 = vmatprep.mubr.f32.mxu0 0.0
      %777 = vmatmul.mubr.f32.gmra.mxu0 %v684
      %v778 = vpop.f32.mrf.mxu0
      %v779 = vadd.f32 0.0, %v778
      %v780 = vpop.f32.mrf.mxu0
      %781 = vmatprep.mubr.f32.mxu0 0.0
      %782 = vmatmul.mubr.f32.gmra.mxu0 %v685
      %v783 = vpop.f32.mrf.mxu0
      %v784 = vadd.f32 0.0, %v783
      %v785 = vpop.f32.mrf.mxu0
      %786 = vmatprep.mubr.f32.mxu0 0.0
      %787 = vmatmul.mubr.f32.gmra.mxu0 %v686
      %v788 = vpop.f32.mrf.mxu0
      %v789 = vadd.f32 0.0, %v788
      %v790 = vpop.f32.mrf.mxu0
      %791 = vmatprep.mubr.f32.mxu0 0.0
      %792 = vmatmul.mubr.f32.gmra.mxu0 %v687
      %v793 = vpop.f32.mrf.mxu0
      %v794 = vadd.f32 0.0, %v793
      %v795 = vpop.f32.mrf.mxu0
      %796 = vmatprep.mubr.f32.mxu0 0.0
      %797 = vmatmul.mubr.f32.gmra.mxu0 %v688
      %v798 = vpop.f32.mrf.mxu0
      %v799 = vadd.f32 0.0, %v798
      %v800 = vpop.f32.mrf.mxu0
      %801 = vmatprep.mubr.f32.mxu0 0.0
      %802 = vmatmul.mubr.f32.gmra.mxu0 %v689
      %v803 = vpop.f32.mrf.mxu0
      %v804 = vadd.f32 0.0, %v803
      %v805 = vpop.f32.mrf.mxu0
      %806 = vmatprep.mubr.f32.mxu0 0.0
      %807 = vmatmul.mubr.f32.gmra.mxu0 %v690
      %v808 = vpop.f32.mrf.mxu0
      %v809 = vadd.f32 0.0, %v808
      %v810 = vpop.f32.mrf.mxu0
      %811 = vdwg.mxu0
      %v812 = vld [vmem:[%s5] sm:$0xff]
      %v813 = vld [vmem:[%s5 + $0x8] sm:$0xff]
      %v814 = vld [vmem:[%s5 + $0x10] sm:$0xff]
      %v815 = vld [vmem:[%s5 + $0x18] sm:$0xff]
      %v816 = vld [vmem:[%s5 + $0x20] sm:$0xff]
      %v817 = vld [vmem:[%s5 + $0x28] sm:$0xff]
      %v818 = vld [vmem:[%s5 + $0x30] sm:$0xff]
      %v819 = vld [vmem:[%s5 + $0x38] sm:$0xff]
      %821 = vset.pattern.permute.xlu0 0
      %822 = vperm.xlu0 %821, %v812
      %v823 = vpop.permute.xlu0 %822
      %826 = vset.pattern.permute.xlu0 0
      %827 = vperm.xlu0 %826, %v813
      %v828 = vpop.permute.xlu0 %827
      %831 = vset.pattern.permute.xlu0 0
      %832 = vperm.xlu0 %831, %v814
      %v833 = vpop.permute.xlu0 %832
      %836 = vset.pattern.permute.xlu0 0
      %837 = vperm.xlu0 %836, %v815
      %v838 = vpop.permute.xlu0 %837
      %841 = vset.pattern.permute.xlu0 0
      %842 = vperm.xlu0 %841, %v816
      %v843 = vpop.permute.xlu0 %842
      %846 = vset.pattern.permute.xlu0 0
      %847 = vperm.xlu0 %846, %v817
      %v848 = vpop.permute.xlu0 %847
      %851 = vset.pattern.permute.xlu0 0
      %852 = vperm.xlu0 %851, %v818
      %v853 = vpop.permute.xlu0 %852
      %856 = vset.pattern.permute.xlu0 0
      %857 = vperm.xlu0 %856, %v819
      %v858 = vpop.permute.xlu0 %857
      %v860 = vadd.f32 %v774, %v823
      %v861 = vadd.f32 %v779, %v828
      %v862 = vadd.f32 %v784, %v833
      %v863 = vadd.f32 %v789, %v838
      %v864 = vadd.f32 %v794, %v843
      %v865 = vadd.f32 %v799, %v848
      %v866 = vadd.f32 %v804, %v853
      %v867 = vadd.f32 %v809, %v858
      %v868 = vmax.f32 %v860, %v864
      %v869 = vmax.f32 %v861, %v865
      %v870 = vmax.f32 %v862, %v866
      %v871 = vmax.f32 %v863, %v867
      %v872 = vmax.f32 %v868, %v869
      %v873 = vmax.f32 %v870, %v871
      %v874 = vmax.f32 %v872, %v873
      %v875 = vsub.f32 %v860, %v874
      %v876 = vsub.f32 %v861, %v874
      %v877 = vsub.f32 %v862, %v874
      %v878 = vsub.f32 %v863, %v874
      %v879 = vsub.f32 %v864, %v874
      %v880 = vsub.f32 %v865, %v874
      %v881 = vsub.f32 %v866, %v874
      %v882 = vsub.f32 %v867, %v874
      %v883 = vmul.f32 %v875, 1.442695
      %v884 = vpow.pop %v883
      %v885 = vmul.f32 %v876, 1.442695
      %v886 = vpow.pop %v885
      %v887 = vmul.f32 %v877, 1.442695
      %v888 = vpow.pop %v887
      %v889 = vmul.f32 %v878, 1.442695
      %v890 = vpow.pop %v889
      %v891 = vmul.f32 %v879, 1.442695
      %v892 = vpow.pop %v891
      %v893 = vmul.f32 %v880, 1.442695
      %v894 = vpow.pop %v893
      %v895 = vmul.f32 %v881, 1.442695
      %v896 = vpow.pop %v895
      %v897 = vmul.f32 %v882, 1.442695
      %v898 = vpow.pop %v897
      %v899 = vld [vmem:[%s4] sm:$0xff]
      %v900 = vld [vmem:[%s4 + $0x8] sm:$0xff]
      %v901 = vld [vmem:[%s4 + $0x10] sm:$0xff]
      %v902 = vld [vmem:[%s4 + $0x18] sm:$0xff]
      %v903 = vld [vmem:[%s4 + $0x20] sm:$0xff]
      %v904 = vld [vmem:[%s4 + $0x28] sm:$0xff]
      %v905 = vld [vmem:[%s4 + $0x30] sm:$0xff]
      %v906 = vld [vmem:[%s4 + $0x38] sm:$0xff]
      %908 = vset.pattern.permute.xlu0 0
      %909 = vperm.xlu0 %908, %v899
      %v910 = vpop.permute.xlu0 %909
      %913 = vset.pattern.permute.xlu0 0
      %914 = vperm.xlu0 %913, %v900
      %v915 = vpop.permute.xlu0 %914
      %918 = vset.pattern.permute.xlu0 0
      %919 = vperm.xlu0 %918, %v901
      %v920 = vpop.permute.xlu0 %919
      %923 = vset.pattern.permute.xlu0 0
      %924 = vperm.xlu0 %923, %v902
      %v925 = vpop.permute.xlu0 %924
      %928 = vset.pattern.permute.xlu0 0
      %929 = vperm.xlu0 %928, %v903
      %v930 = vpop.permute.xlu0 %929
      %933 = vset.pattern.permute.xlu0 0
      %934 = vperm.xlu0 %933, %v904
      %v935 = vpop.permute.xlu0 %934
      %938 = vset.pattern.permute.xlu0 0
      %939 = vperm.xlu0 %938, %v905
      %v940 = vpop.permute.xlu0 %939
      %943 = vset.pattern.permute.xlu0 0
      %944 = vperm.xlu0 %943, %v906
      %v945 = vpop.permute.xlu0 %944
      %v947 = vmul.f32 %v884, %v910
      %v948 = vmul.f32 %v886, %v915
      %v949 = vmul.f32 %v888, %v920
      %v950 = vmul.f32 %v890, %v925
      %v951 = vmul.f32 %v892, %v930
      %v952 = vmul.f32 %v894, %v935
      %v953 = vmul.f32 %v896, %v940
      %v954 = vmul.f32 %v898, %v945
      %v955 = vadd.f32 %v884, %v886
      %v956 = vadd.f32 %v955, %v888
      %v957 = vadd.f32 %v956, %v890
      %v958 = vadd.f32 %v957, %v892
      %v959 = vadd.f32 %v958, %v894
      %v960 = vadd.f32 %v959, %v896
      %v961 = vadd.f32 %v960, %v898
      %v962 = vadd.f32 %v947, %v948
      %v963 = vadd.f32 %v962, %v949
      %v964 = vadd.f32 %v963, %v950
      %v965 = vadd.f32 %v964, %v951
      %v966 = vadd.f32 %v965, %v952
      %v967 = vadd.f32 %v966, %v953
      %v968 = vadd.f32 %v967, %v954
      %v969 = vmul.f32 %v961, 1e-10
      %v970 = vadd.f32 %v968, %v969
      %v971 = vrcp.pop %v970
      %v972 = vmul.f32 %v947, %v971
      %v973 = vmul.f32 %v948, %v971
      %v974 = vmul.f32 %v949, %v971
      %v975 = vmul.f32 %v950, %v971
      %v976 = vmul.f32 %v951, %v971
      %v977 = vmul.f32 %v952, %v971
      %v978 = vmul.f32 %v953, %v971
      %v979 = vmul.f32 %v954, %v971
      %v980 = vmul.f32 %v972, %v144
      %v981 = vmul.f32 %v973, %v145
      %v982 = vmul.f32 %v974, %v146
      %v983 = vmul.f32 %v975, %v147
      %v984 = vmul.f32 %v976, %v148
      %v985 = vmul.f32 %v977, %v149
      %v986 = vmul.f32 %v978, %v150
      %v987 = vmul.f32 %v979, %v151
      %v988 = vadd.f32 %v980, %v981
      %v989 = vadd.f32 %v988, %v982
      %v990 = vadd.f32 %v989, %v983
      %v991 = vadd.f32 %v990, %v984
      %v992 = vadd.f32 %v991, %v985
      %v993 = vadd.f32 %v992, %v986
      %v994 = vadd.f32 %v993, %v987
      %v995 = vld [vmem:[#allocation11] sm:$0xff]
      %v996 = vld [vmem:[#allocation11 + $0x8] sm:$0xff]
      %v997 = vld [vmem:[#allocation11 + $0x10] sm:$0xff]
      %v998 = vld [vmem:[#allocation11 + $0x18] sm:$0xff]
      %v999 = vld [vmem:[#allocation11 + $0x20] sm:$0xff]
      %v1000 = vld [vmem:[#allocation11 + $0x28] sm:$0xff]
      %v1001 = vld [vmem:[#allocation11 + $0x30] sm:$0xff]
      %v1002 = vld [vmem:[#allocation11 + $0x38] sm:$0xff]
      %v1003 = vld [vmem:[#allocation11 + $0x40] sm:$0xff]
      %v1004 = vld [vmem:[#allocation11 + $0x48] sm:$0xff]
      %v1005 = vld [vmem:[#allocation11 + $0x50] sm:$0xff]
      %v1006 = vld [vmem:[#allocation11 + $0x58] sm:$0xff]
      %v1007 = vld [vmem:[#allocation11 + $0x60] sm:$0xff]
      %v1008 = vld [vmem:[#allocation11 + $0x68] sm:$0xff]
      %v1009 = vld [vmem:[#allocation11 + $0x70] sm:$0xff]
      %v1010 = vld [vmem:[#allocation11 + $0x78] sm:$0xff]
      %v1011 = vld [vmem:[#allocation11 + $0x80] sm:$0xff]
      %v1012 = vld [vmem:[#allocation11 + $0x88] sm:$0xff]
      %v1013 = vld [vmem:[#allocation11 + $0x90] sm:$0xff]
      %v1014 = vld [vmem:[#allocation11 + $0x98] sm:$0xff]
      %v1015 = vld [vmem:[#allocation11 + $0xa0] sm:$0xff]
      %v1016 = vld [vmem:[#allocation11 + $0xa8] sm:$0xff]
      %v1017 = vld [vmem:[#allocation11 + $0xb0] sm:$0xff]
      %v1018 = vld [vmem:[#allocation11 + $0xb8] sm:$0xff]
      %v1019 = vld [vmem:[#allocation11 + $0xc0] sm:$0xff]
      %v1020 = vld [vmem:[#allocation11 + $0xc8] sm:$0xff]
      %v1021 = vld [vmem:[#allocation11 + $0xd0] sm:$0xff]
      %v1022 = vld [vmem:[#allocation11 + $0xd8] sm:$0xff]
      %v1023 = vld [vmem:[#allocation11 + $0xe0] sm:$0xff]
      %v1024 = vld [vmem:[#allocation11 + $0xe8] sm:$0xff]
      %v1025 = vld [vmem:[#allocation11 + $0xf0] sm:$0xff]
      %v1026 = vld [vmem:[#allocation11 + $0xf8] sm:$0xff]
      %v1027 = vld [vmem:[%s12] sm:$0x1]
      %v1029 = vlaneseq
      %v1030 = vshrl.u32 %v1029, 7
      %v1031 = vsub.s32 0, %v1030
      %v1032 = vrot.slane %v1027, %v1031
      %1034 = vmatprep.subr.mxu0 0.0
      %1035 = vmatpush1.msra.mxu0 %v1010
      %1036 = vmatprep.subr.mxu0 0.0
      %1037 = vmatpush1.msra.mxu0 %v1009
      %1038 = vmatprep.subr.mxu0 0.0
      %1039 = vmatpush1.msra.mxu0 %v1008
      %1040 = vmatprep.subr.mxu0 0.0
      %1041 = vmatpush1.msra.mxu0 %v1007
      %1042 = vmatprep.subr.mxu0 0.0
      %1043 = vmatpush1.msra.mxu0 %v1006
      %1044 = vmatprep.subr.mxu0 0.0
      %1045 = vmatpush1.msra.mxu0 %v1005
      %1046 = vmatprep.subr.mxu0 0.0
      %1047 = vmatpush1.msra.mxu0 %v1004
      %1048 = vmatprep.subr.mxu0 0.0
      %1049 = vmatpush1.msra.mxu0 %v1003
      %1050 = vmatprep.subr.mxu0 0.0
      %1051 = vmatpush1.msra.mxu0 %v1002
      %1052 = vmatprep.subr.mxu0 0.0
      %1053 = vmatpush1.msra.mxu0 %v1001
      %1054 = vmatprep.subr.mxu0 0.0
      %1055 = vmatpush1.msra.mxu0 %v1000
      %1056 = vmatprep.subr.mxu0 0.0
      %1057 = vmatpush1.msra.mxu0 %v999
      %1058 = vmatprep.subr.mxu0 0.0
      %1059 = vmatpush1.msra.mxu0 %v998
      %1060 = vmatprep.subr.mxu0 0.0
      %1061 = vmatpush1.msra.mxu0 %v997
      %1062 = vmatprep.subr.mxu0 0.0
      %1063 = vmatpush1.msra.mxu0 %v996
      %1064 = vmatprep.subr.mxu0 0.0
      %1065 = vmatpush1.msra.mxu0 %v995
      %1066 = vmatprep.subr.mxu0 0.0
      %1067 = vmatpush2.msra.mxu0 %v1026
      %1068 = vmatprep.subr.mxu0 0.0
      %1069 = vmatpush2.msra.mxu0 %v1025
      %1070 = vmatprep.subr.mxu0 0.0
      %1071 = vmatpush2.msra.mxu0 %v1024
      %1072 = vmatprep.subr.mxu0 0.0
      %1073 = vmatpush2.msra.mxu0 %v1023
      %1074 = vmatprep.subr.mxu0 0.0
      %1075 = vmatpush2.msra.mxu0 %v1022
      %1076 = vmatprep.subr.mxu0 0.0
      %1077 = vmatpush2.msra.mxu0 %v1021
      %1078 = vmatprep.subr.mxu0 0.0
      %1079 = vmatpush2.msra.mxu0 %v1020
      %1080 = vmatprep.subr.mxu0 0.0
      %1081 = vmatpush2.msra.mxu0 %v1019
      %1082 = vmatprep.subr.mxu0 0.0
      %1083 = vmatpush2.msra.mxu0 %v1018
      %1084 = vmatprep.subr.mxu0 0.0
      %1085 = vmatpush2.msra.mxu0 %v1017
      %1086 = vmatprep.subr.mxu0 0.0
      %1087 = vmatpush2.msra.mxu0 %v1016
      %1088 = vmatprep.subr.mxu0 0.0
      %1089 = vmatpush2.msra.mxu0 %v1015
      %1090 = vmatprep.subr.mxu0 0.0
      %1091 = vmatpush2.msra.mxu0 %v1014
      %1092 = vmatprep.subr.mxu0 0.0
      %1093 = vmatpush2.msra.mxu0 %v1013
      %1094 = vmatprep.subr.mxu0 0.0
      %1095 = vmatpush2.msra.mxu0 %v1012
      %1096 = vmatprep.subr.mxu0 0.0
      %1097 = vmatpush2.msra.mxu0 %v1011
      %1098 = vmatprep.mubr.f32.mxu0 %v994
      %1099 = vmatmul.mubr.f32.gmra.mxu0 %v467
      %v1100 = vpop.f32.mrf.mxu0
      %v1101 = vadd.f32 %v1032, %v1100
      %v1102 = vpop.f32.mrf.mxu0
      %1103 = vdwg.mxu0
      %v1104 = vtanh.pop %v1101
      %1105 = vst [vmem:[#allocation2] sm:$0xff] %v1104
      %1106 = vst [vmem:[#allocation15] sm:$0xff] %v467
      %1107 = vst [vmem:[#allocation17] sm:$0xff] %v465
    $region89: #{tpu_custom_call.1} parent=1 // pred_fallthru
      _
    %v1108 = vld [vmem:[#allocation2] sm:$0xff]
    %v1109 = vld [vmem:[#allocation12] sm:$0xff]
    %v1110 = vld [vmem:[#allocation12 + $0x8] sm:$0xff]
    %v1111 = vld [vmem:[#allocation12 + $0x10] sm:$0xff]
    %v1112 = vld [vmem:[#allocation12 + $0x18] sm:$0xff]
    %v1113 = vld [vmem:[#allocation12 + $0x20] sm:$0xff]
    %v1114 = vld [vmem:[#allocation12 + $0x28] sm:$0xff]
    %v1115 = vld [vmem:[#allocation12 + $0x30] sm:$0xff]
    %v1116 = vld [vmem:[#allocation12 + $0x38] sm:$0xff]
    %v1117 = vld [vmem:[#allocation12 + $0x40] sm:$0xff]
    %v1118 = vld [vmem:[#allocation12 + $0x48] sm:$0xff]
    %v1119 = vld [vmem:[#allocation12 + $0x50] sm:$0xff]
    %v1120 = vld [vmem:[#allocation12 + $0x58] sm:$0xff]
    %v1121 = vld [vmem:[#allocation12 + $0x60] sm:$0xff]
    %v1122 = vld [vmem:[#allocation12 + $0x68] sm:$0xff]
    %v1123 = vld [vmem:[#allocation12 + $0x70] sm:$0xff]
    %v1124 = vld [vmem:[#allocation12 + $0x78] sm:$0xff]
    %v1125 = vld [vmem:[%s14] sm:$0x1]
    %v1127 = vlaneseq
    %v1128 = vshrl.u32 %v1127, 7
    %v1129 = vsub.s32 0, %v1128
    %v1130 = vrot.slane %v1125, %v1129
    %1132 = vmatprep.subr.mxu0 0.0
    %1133 = vmatpush1.msra.mxu0 %v1124
    %1134 = vmatprep.subr.mxu0 0.0
    %1135 = vmatpush1.msra.mxu0 %v1123
    %1136 = vmatprep.subr.mxu0 0.0
    %1137 = vmatpush1.msra.mxu0 %v1122
    %1138 = vmatprep.subr.mxu0 0.0
    %1139 = vmatpush1.msra.mxu0 %v1121
    %1140 = vmatprep.subr.mxu0 0.0
    %1141 = vmatpush1.msra.mxu0 %v1120
    %1142 = vmatprep.subr.mxu0 0.0
    %1143 = vmatpush1.msra.mxu0 %v1119
    %1144 = vmatprep.subr.mxu0 0.0
    %1145 = vmatpush1.msra.mxu0 %v1118
    %1146 = vmatprep.subr.mxu0 0.0
    %1147 = vmatpush1.msra.mxu0 %v1117
    %1148 = vmatprep.subr.mxu0 0.0
    %1149 = vmatpush1.msra.mxu0 %v1116
    %1150 = vmatprep.subr.mxu0 0.0
    %1151 = vmatpush1.msra.mxu0 %v1115
    %1152 = vmatprep.subr.mxu0 0.0
    %1153 = vmatpush1.msra.mxu0 %v1114
    %1154 = vmatprep.subr.mxu0 0.0
    %1155 = vmatpush1.msra.mxu0 %v1113
    %1156 = vmatprep.subr.mxu0 0.0
    %1157 = vmatpush1.msra.mxu0 %v1112
    %1158 = vmatprep.subr.mxu0 0.0
    %1159 = vmatpush1.msra.mxu0 %v1111
    %1160 = vmatprep.subr.mxu0 0.0
    %1161 = vmatpush1.msra.mxu0 %v1110
    %1162 = vmatprep.subr.mxu0 0.0
    %1163 = vmatpush1.msra.mxu0 %v1109
    %1164 = vmatprep.subr.mxu0 0.0
    %1165 = vmatpush2.msra.mxu0 0.0
    %1166 = vmatprep.subr.mxu0 0.0
    %1167 = vmatpush2.msra.mxu0 0.0
    %1168 = vmatprep.subr.mxu0 0.0
    %1169 = vmatpush2.msra.mxu0 0.0
    %1170 = vmatprep.subr.mxu0 0.0
    %1171 = vmatpush2.msra.mxu0 0.0
    %1172 = vmatprep.subr.mxu0 0.0
    %1173 = vmatpush2.msra.mxu0 0.0
    %1174 = vmatprep.subr.mxu0 0.0
    %1175 = vmatpush2.msra.mxu0 0.0
    %1176 = vmatprep.subr.mxu0 0.0
    %1177 = vmatpush2.msra.mxu0 0.0
    %1178 = vmatprep.subr.mxu0 0.0
    %1179 = vmatpush2.msra.mxu0 0.0
    %1180 = vmatprep.subr.mxu0 0.0
    %1181 = vmatpush2.msra.mxu0 0.0
    %1182 = vmatprep.subr.mxu0 0.0
    %1183 = vmatpush2.msra.mxu0 0.0
    %1184 = vmatprep.subr.mxu0 0.0
    %1185 = vmatpush2.msra.mxu0 0.0
    %1186 = vmatprep.subr.mxu0 0.0
    %1187 = vmatpush2.msra.mxu0 0.0
    %1188 = vmatprep.subr.mxu0 0.0
    %1189 = vmatpush2.msra.mxu0 0.0
    %1190 = vmatprep.subr.mxu0 0.0
    %1191 = vmatpush2.msra.mxu0 0.0
    %1192 = vmatprep.subr.mxu0 0.0
    %1193 = vmatpush2.msra.mxu0 0.0
    %1194 = vmatprep.subr.mxu0 0.0
    %1195 = vmatpush2.msra.mxu0 0.0
    %1196 = vmatprep.mubr.f32.mxu0 0.0
    %1197 = vmatmul.mubr.f32.gmra.mxu0 %v1108
    %v1198 = vpop.f32.mrf.mxu0
    %v1199 = vadd.f32 %v1130, %v1198
    %v1200 = vpop.f32.mrf.mxu0
    %1201 = vdwg.mxu0
    %1202 = vst [vmem:[#allocation14] sm:$0xff] %v1199
    // Predicated region
    $region90: #{tpu_custom_call.1} parent=1 // pred_check
      _
    $region91: #{tpu_custom_call.1} parent=1 // pred_check_branch
      %1204 = sbr.rel (0) target = $region93
    $region92: #{tpu_custom_call.1} parent=1 // pred_region
      %s1206 = ssub.s32 128, 128
      %1207 = vsyncadd [#allocation5], %s1206
      %s1209 = sshll.u32 [#allocation14], 4
      %s1210 = int_to_ptr.vmem [resolvable:$true] %s1209
      %1212 = dma.vmem_to_hbm [thread:$0]  %s1210, 128, %s15, [#allocation5]
    $region93: #{tpu_custom_call.1} parent=1 // pred_fallthru
      _
    // Predicated region
    $region94: #{tpu_custom_call.1} parent=1 // pred_check
      _
    $region95: #{tpu_custom_call.1} parent=1 // pred_check_branch
      %1214 = sbr.rel (0) target = $region97
    $region96: #{tpu_custom_call.1} parent=1 // pred_region
      %s1216 = ssub.s32 128, 128
      %1217 = vsyncadd [#allocation16], %s1216
      %s1219 = sshll.u32 [#allocation15], 4
      %s1220 = int_to_ptr.vmem [resolvable:$true] %s1219
      %1222 = dma.vmem_to_hbm [thread:$0]  %s1220, 128, %s16, [#allocation16]
    $region97: #{tpu_custom_call.1} parent=1 // pred_fallthru
      _
    // Predicated region
    $region98: #{tpu_custom_call.1} parent=1 // pred_check
      _
    $region99: #{tpu_custom_call.1} parent=1 // pred_check_branch
      %1224 = sbr.rel (0) target = $region101
    $region100: #{tpu_custom_call.1} parent=1 // pred_region
      %s1226 = ssub.s32 128, 128
      %1227 = vsyncadd [#allocation16], %s1226
      %s1229 = sshll.u32 [#allocation17], 4
      %s1230 = int_to_ptr.vmem [resolvable:$true] %s1229
      %1232 = dma.vmem_to_hbm [thread:$0]  %s1230, 128, %s17, [#allocation16]
    $region101: #{tpu_custom_call.1} parent=1 // pred_fallthru
      _
    // Predicated region
    $region102: #{tpu_custom_call.1} parent=1 // pred_check
      _
    $region103: #{tpu_custom_call.1} parent=1 // pred_check_branch
      %1234 = sbr.rel (0) target = $region105
    $region104: #{tpu_custom_call.1} parent=1 // pred_region
      %1235 = dma.done [#allocation5], 128
    $region105: #{tpu_custom_call.1} parent=1 // pred_fallthru
      _
    // Predicated region
    $region106: #{tpu_custom_call.1} parent=1 // pred_check
      _
    $region107: #{tpu_custom_call.1} parent=1 // pred_check_branch
      %1237 = sbr.rel (0) target = $region109
    $region108: #{tpu_custom_call.1} parent=1 // pred_region
      %1238 = dma.done [#allocation16], 128
    $region109: #{tpu_custom_call.1} parent=1 // pred_fallthru
      _
    // Predicated region
    $region110: #{tpu_custom_call.1} parent=1 // pred_check
      _
    $region111: #{tpu_custom_call.1} parent=1 // pred_check_branch
      %1240 = sbr.rel (0) target = $region113
    $region112: #{tpu_custom_call.1} parent=1 // pred_region
      %1241 = dma.done [#allocation16], 128
    $region113: #{tpu_custom_call.1} parent=1 // pred_fallthru
      _
    %1242 = vsyncpa [#allocation4], 1
    %1243 = vsyncpa [#allocation7], 1
    %1244 = vsyncpa [#allocation10], 1
    %1245 = vsyncpa [#allocation13], 1
    %1246 = vsyncpa [#allocation5], 1
    %1247 = vsyncpa [#allocation16], 1

</llo_original>
